<compile_context>
chip_gen: v7x
topology: tpu7x:2x2x1
jax: 0.10.0
libtpu: 0.0.40
codegen_flags: <defaults>
</compile_context>

<pallas_src>
import jax
import jax.numpy as jnp
from jax import lax
from jax.experimental import pallas as pl
from jax.experimental.pallas import tpu as pltpu

IN_DIM = 4096
HID = 64
OUT_DIM = 1
BN_EPS = 1e-5


def _round_up(n, m):
    return ((n + m - 1) // m) * m


def _vmem_capacity_bytes():
    try:
        return int(pltpu.get_tpu_info().vmem_capacity_bytes)
    except Exception:
        return 64 << 20  # conservative fallback (v7x physical VMEM)


def _choose_tiling(B, x_elt):
    """Pick (bm, n_tiles, pad_rows, vmem_limit_bytes) for batch B.

    bm is a multiple of 128 for B >= 128 (lane-dense output stores, valid
    sublane tiling for f32/bf16/int8), sized against the chip's VMEM, and the
    batch is split into >= 2 tiles when possible so v7x's two TensorCores are
    both used.  Tiny batches (B < 128) use a single minimally-padded tile.
    """
    vmem_cap = _vmem_capacity_bytes()
    # Headroom for compiler-internal scratch; also cap on 128 MiB chips.
    vmem_limit_cap = min(vmem_cap - (16 << 20), 112 << 20)

    # bm-independent bytes: parameters are double-buffered by the pipeline.
    param_bytes = IN_DIM * HID * x_elt + (HID * HID + 3 * HID) * 4
    fixed = 2 * param_bytes + (4 << 20)  # + margin for output / scratch

    if B < 128:
        # Tiny batch: one tile, pad to the dtype sublane minimum.  The masked
        # (1, bm) output store is irrelevant at this size.
        sub = 16 if x_elt < 4 else 8
        bm = _round_up(B, sub)
        return bm, 1, bm - B, 32 << 20

    # x tile is double-buffered: 2 * bm * IN_DIM * x_elt bytes.
    bm_max = (vmem_limit_cap - fixed) // (2 * IN_DIM * x_elt)
    bm_max = max((bm_max // 128) * 128, 128)
    bm_max = min(bm_max, 2048)  # diminishing returns past ~2K rows

    min_tiles = 2 if B > 128 else 1          # keep both v7x TCs busy
    n_tiles = max(pl.cdiv(B, bm_max), min_tiles)
    bm = _round_up(pl.cdiv(B, n_tiles), 128)
    n_tiles = pl.cdiv(B, bm)

    vmem_est = 2 * bm * IN_DIM * x_elt + 2 * param_bytes + 4 * bm * 4 + (4 << 20)
    vmem_limit = int(min(max(vmem_est, 32 << 20), vmem_limit_cap))
    return bm, n_tiles, 0, vmem_limit


def _mlp_kernel(x_ref, w1_ref, b1_ref, w2_ref, b2_ref, wot_ref, o_ref):
    # layer_1 + ReLU (x / w1 may be bf16; accumulate in f32 on the MXU).
    h = jnp.dot(x_ref[...], w1_ref[...], preferred_element_type=jnp.float32)
    h = jnp.maximum(h + b1_ref[...], 0.0)                        # [bm, 64]

    # batch_norm1 folded into (w2, b2) in the wrapper; layer_2 + ReLU.
    h = jnp.dot(h, w2_ref[...], preferred_element_type=jnp.float32)
    h = jnp.maximum(h + b2_ref[...], 0.0)                        # [bm, 64]

    # batch_norm2 folded into wo; dropout(p=0.1) is identity in eval.
    # layer_out computed as wo_row @ h^T -> (1, bm): batch lands on the lane
    # axis so the store is lane-dense (unmasked vst when bm % 128 == 0).
    o_ref[...] = lax.dot_general(wot_ref[...], h, (((1,), (1,)), ((), ())),
                                 preferred_element_type=jnp.float32)


def classification_model_forward(x, params):
    """x: [B, 4096] (float32 or bfloat16).  Returns [B, 1] float32 (eval)."""
    B, F = x.shape
    assert F == IN_DIM
    assert x.dtype in (jnp.float32, jnp.bfloat16), "supply f32 or bf16 inputs"

    (w1, b1, g1, be1, m1, v1,
     w2, b2, g2, be2, m2, v2,
     wo, bo) = params

    # ---- Fold eval-mode BatchNorms into the following Linear layers --------
    s1 = g1 * lax.rsqrt(v1 + BN_EPS)                  # (1, HID)
    w2f = w2 * s1.reshape(HID, 1)                     # (HID, HID)
    b2f = (be1 - m1 * s1) @ w2 + b2                   # (1, HID)
    s2 = g2 * lax.rsqrt(v2 + BN_EPS)                  # (1, HID)
    wot = (wo * s2.reshape(HID, 1)).T                 # (1, HID)   == wo'^T
    bof = (be2 - m2 * s2) @ wo + bo                   # (1, 1), added post-kernel

    # First-layer operands follow x's dtype.  We deliberately do NOT cast x
    # here (that would be an extra HBM pass over the dominant operand); pass
    # bf16 x from upstream to halve the kernel's HBM traffic.
    w1_c = w1.astype(x.dtype)
    b1f = b1.astype(jnp.float32)

    elt = jnp.dtype(x.dtype).itemsize
    bm, n_tiles, pad_rows, vmem_limit = _choose_tiling(B, elt)
    x_in = jnp.pad(x, ((0, pad_rows), (0, 0))) if pad_rows else x

    cost = pl.CostEstimate(
        flops=int(2 * n_tiles * bm * (IN_DIM * HID + HID * HID + HID)),
        transcendentals=0,
        bytes_accessed=int(B * IN_DIM * elt + IN_DIM * HID * elt
                           + (HID * HID + 3 * HID) * 4 + n_tiles * bm * 4),
    )

    def const_spec(shape):  # parameters, constant across grid steps
        return pl.BlockSpec(shape, lambda i: (0, 0))

    out = pl.pallas_call(
        _mlp_kernel,
        out_shape=jax.ShapeDtypeStruct((n_tiles, bm), jnp.float32),
        grid_spec=pltpu.PrefetchScalarGridSpec(
            num_scalar_prefetch=0,
            grid=(n_tiles,),
            in_specs=[
                pl.BlockSpec((bm, IN_DIM), lambda i: (i, 0)),   # x tile
                const_spec((IN_DIM, HID)),                      # w1
                const_spec((1, HID)),                           # b1
                const_spec((HID, HID)),                         # w2 (BN1 folded)
                const_spec((1, HID)),                           # b2 (BN1 folded)
                const_spec((1, HID)),                           # wo^T (BN2 folded)
            ],
            out_specs=pl.BlockSpec((1, bm), lambda i: (i, 0)),
        ),
        compiler_params=pltpu.CompilerParams(
            dimension_semantics=("parallel",),
            vmem_limit_bytes=vmem_limit),
        cost_estimate=cost,
    )(x_in, w1_c, b1f, w2f, b2f, wot)

    # layer_out bias added here on the tiny [B,1] result instead of shipping a
    # (1,1) VMEM operand through the kernel.
    return out.reshape(n_tiles * bm, 1)[:B] + bof


def init_params(key):
    """Deterministic synthetic parameters (shapes from the module __init__)."""
    ks = jax.random.split(key, 10)

    def lin(kw, kb, fan_in, fan_out):
        bound = 1.0 / jnp.sqrt(fan_in)
        w = jax.random.uniform(kw, (fan_in, fan_out), jnp.float32, -bound, bound)
        b = jax.random.uniform(kb, (1, fan_out), jnp.float32, -bound, bound)
        return w, b

    w1, b1 = lin(ks[0], ks[1], IN_DIM, HID)
    w2, b2 = lin(ks[2], ks[3], HID, HID)
    wo, bo = lin(ks[4], ks[5], HID, OUT_DIM)

    g1 = 1.0 + 0.1 * jax.random.normal(ks[6], (1, HID), jnp.float32)
    be1 = 0.1 * jax.random.normal(ks[7], (1, HID), jnp.float32)
    m1 = 0.05 * jax.random.normal(ks[8], (1, HID), jnp.float32)
    v1 = 1.0 + 0.1 * jnp.abs(jax.random.normal(ks[9], (1, HID), jnp.float32))

    g2 = jnp.ones((1, HID), jnp.float32)
    be2 = jnp.zeros((1, HID), jnp.float32)
    m2 = jnp.zeros((1, HID), jnp.float32)
    v2 = jnp.ones((1, HID), jnp.float32)

    return (w1, b1, g1, be1, m1, v1,
            w2, b2, g2, be2, m2, v2,
            wo, bo)


def _reference(x, params):
    (w1, b1, g1, be1, m1, v1,
     w2, b2, g2, be2, m2, v2,
     wo, bo) = params
    h = jnp.maximum(x @ w1 + b1, 0.0)
    h = (h - m1) * (g1 / jnp.sqrt(v1 + BN_EPS)) + be1
    h = jnp.maximum(h @ w2 + b2, 0.0)
    h = (h - m2) * (g2 / jnp.sqrt(v2 + BN_EPS)) + be2
    return h @ wo + bo


if __name__ == "__main__":
    key = jax.random.PRNGKey(0)
    kp, kx1, kx2 = jax.random.split(key, 3)
    params = init_params(kp)

    # 1) tiny ragged batch: single-tile, minimally padded path.
    x_small = jax.random.normal(kx1, (12, IN_DIM), jnp.float32)
    out = jax.block_until_ready(classification_model_forward(x_small, params))
    ref = _reference(x_small, params)
    assert out.shape == (12, OUT_DIM)
    assert jnp.allclose(out, ref, atol=1e-4, rtol=1e-4), "mismatch (small batch)"

    # 2) ragged multi-tile batch: no padded copy, boundary block on the last
    #    tile, >= 2 tiles so both v7x TensorCores are used.
    x_mid = jax.random.normal(kx2, (200, IN_DIM), jnp.float32)
    out = jax.block_until_ready(classification_model_forward(x_mid, params))
    ref = _reference(x_mid, params)
    assert out.shape == (200, OUT_DIM)
    assert jnp.allclose(out, ref, atol=1e-4, rtol=1e-4), "mismatch (multi-tile)"

    # 3) bf16 fast path: x supplied in bf16 upstream (halves the dominant HBM
    #    traffic); f32 accumulation kept, so only input-rounding error remains.
    x_bf = x_mid.astype(jnp.bfloat16)
    out_bf = jax.block_until_ready(classification_model_forward(x_bf, params))
    ref_bf = _reference(x_bf.astype(jnp.float32), params)
    assert jnp.allclose(out_bf, ref_bf, atol=5e-2, rtol=5e-2), "mismatch (bf16)"

    print("KERNEL_OK")
</pallas_src>

<mosaic_0001>
module attributes {stable_mosaic.version = 11 : i64} {
  func.func @_mlp_kernel(%arg0: i32, %arg1: memref<16x4096xf32, #tpu.memory_space<vmem>>, %arg2: memref<4096x64xf32, #tpu.memory_space<vmem>>, %arg3: memref<1x64xf32, #tpu.memory_space<vmem>>, %arg4: memref<64x64xf32, #tpu.memory_space<vmem>>, %arg5: memref<1x64xf32, #tpu.memory_space<vmem>>, %arg6: memref<1x64xf32, #tpu.memory_space<vmem>>, %arg7: memref<1x16xf32, #tpu.memory_space<vmem>>) attributes {dimension_semantics = [#tpu.dimension_semantics<parallel>], iteration_bounds = array<i64: 1>, scalar_prefetch = 0 : i64, scratch_operands = 0 : i64, tpu.core_type = #tpu.core_type<tc>, window_params = [{transform_indices = @transform_0, window_bounds = array<i64: 16, 4096>}, {pipeline_mode = #tpu.pipeline_mode<synchronous>, transform_indices = @transform_1, window_bounds = array<i64: 4096, 64>}, {pipeline_mode = #tpu.pipeline_mode<synchronous>, transform_indices = @transform_2, window_bounds = array<i64: 1, 64>}, {pipeline_mode = #tpu.pipeline_mode<synchronous>, transform_indices = @transform_3, window_bounds = array<i64: 64, 64>}, {pipeline_mode = #tpu.pipeline_mode<synchronous>, transform_indices = @transform_4, window_bounds = array<i64: 1, 64>}, {pipeline_mode = #tpu.pipeline_mode<synchronous>, transform_indices = @transform_5, window_bounds = array<i64: 1, 64>}, {transform_indices = @transform_6, window_bounds = array<i64: 1, 16>}]} {
    %c0 = arith.constant 0 : index
    %c0_0 = arith.constant 0 : index
    %0 = vector.load %arg1[%c0, %c0_0] : memref<16x4096xf32, #tpu.memory_space<vmem>>, vector<16x4096xf32>
    %c0_1 = arith.constant 0 : index
    %c0_2 = arith.constant 0 : index
    %1 = vector.load %arg2[%c0_1, %c0_2] : memref<4096x64xf32, #tpu.memory_space<vmem>>, vector<4096x64xf32>
    %cst = arith.constant dense<0.000000e+00> : vector<16x64xf32>
    %2 = tpu.matmul %0, %1, %cst {dimension_numbers = #tpu.dot_dimension_numbers<[1], [0], [0], [1], [0, 0, 1, 1], [], []>} : vector<16x4096xf32>, vector<4096x64xf32>, vector<16x64xf32> -> vector<16x64xf32>
    %c0_3 = arith.constant 0 : index
    %c0_4 = arith.constant 0 : index
    %3 = vector.load %arg3[%c0_3, %c0_4] : memref<1x64xf32, #tpu.memory_space<vmem>>, vector<1x64xf32>
    %4 = vector.broadcast %3 : vector<1x64xf32> to vector<16x64xf32>
    %5 = arith.addf %2, %4 : vector<16x64xf32>
    %cst_5 = arith.constant 0.000000e+00 : f32
    %6 = vector.broadcast %cst_5 : f32 to vector<16x64xf32>
    %7 = arith.maximumf %5, %6 : vector<16x64xf32>
    %c0_6 = arith.constant 0 : index
    %c0_7 = arith.constant 0 : index
    %8 = vector.load %arg4[%c0_6, %c0_7] : memref<64x64xf32, #tpu.memory_space<vmem>>, vector<64x64xf32>
    %cst_8 = arith.constant dense<0.000000e+00> : vector<16x64xf32>
    %9 = tpu.matmul %7, %8, %cst_8 {dimension_numbers = #tpu.dot_dimension_numbers<[1], [0], [0], [1], [0, 0, 1, 1], [], []>} : vector<16x64xf32>, vector<64x64xf32>, vector<16x64xf32> -> vector<16x64xf32>
    %c0_9 = arith.constant 0 : index
    %c0_10 = arith.constant 0 : index
    %10 = vector.load %arg5[%c0_9, %c0_10] : memref<1x64xf32, #tpu.memory_space<vmem>>, vector<1x64xf32>
    %11 = vector.broadcast %10 : vector<1x64xf32> to vector<16x64xf32>
    %12 = arith.addf %9, %11 : vector<16x64xf32>
    %cst_11 = arith.constant 0.000000e+00 : f32
    %13 = vector.broadcast %cst_11 : f32 to vector<16x64xf32>
    %14 = arith.maximumf %12, %13 : vector<16x64xf32>
    %c0_12 = arith.constant 0 : index
    %c0_13 = arith.constant 0 : index
    %15 = vector.load %arg6[%c0_12, %c0_13] : memref<1x64xf32, #tpu.memory_space<vmem>>, vector<1x64xf32>
    %cst_14 = arith.constant dense<0.000000e+00> : vector<1x16xf32>
    %16 = tpu.matmul %15, %14, %cst_14 {dimension_numbers = #tpu.dot_dimension_numbers<[1], [1], [0], [0], [0, 0, 1, 0], [], []>} : vector<1x64xf32>, vector<16x64xf32>, vector<1x16xf32> -> vector<1x16xf32>
    %c0_15 = arith.constant 0 : index
    %c0_16 = arith.constant 0 : index
    %17 = vector.load %arg7[%c0_15, %c0_16] : memref<1x16xf32, #tpu.memory_space<vmem>>, vector<1x16xf32>
    tpu.vector_store %arg7[%c0_15, %c0_16], %16 {strides = array<i32>} : memref<1x16xf32, #tpu.memory_space<vmem>>, vector<1x16xf32>,
    return
  }
  func.func @transform_0(%arg0: i32) -> (i32, i32) {
    %c0_i32 = arith.constant 0 : i32
    %c0_i32_0 = arith.constant 0 : i32
    return %arg0, %c0_i32 : i32, i32
  }
  func.func @transform_1(%arg0: i32) -> (i32, i32) {
    %c0_i32 = arith.constant 0 : i32
    %c0_i32_0 = arith.constant 0 : i32
    %c0_i32_1 = arith.constant 0 : i32
    return %c0_i32, %c0_i32_0 : i32, i32
  }
  func.func @transform_2(%arg0: i32) -> (i32, i32) {
    %c0_i32 = arith.constant 0 : i32
    %c0_i32_0 = arith.constant 0 : i32
    %c0_i32_1 = arith.constant 0 : i32
    return %c0_i32, %c0_i32_0 : i32, i32
  }
  func.func @transform_3(%arg0: i32) -> (i32, i32) {
    %c0_i32 = arith.constant 0 : i32
    %c0_i32_0 = arith.constant 0 : i32
    %c0_i32_1 = arith.constant 0 : i32
    return %c0_i32, %c0_i32_0 : i32, i32
  }
  func.func @transform_4(%arg0: i32) -> (i32, i32) {
    %c0_i32 = arith.constant 0 : i32
    %c0_i32_0 = arith.constant 0 : i32
    %c0_i32_1 = arith.constant 0 : i32
    return %c0_i32, %c0_i32_0 : i32, i32
  }
  func.func @transform_5(%arg0: i32) -> (i32, i32) {
    %c0_i32 = arith.constant 0 : i32
    %c0_i32_0 = arith.constant 0 : i32
    %c0_i32_1 = arith.constant 0 : i32
    return %c0_i32, %c0_i32_0 : i32, i32
  }
  func.func @transform_6(%arg0: i32) -> (i32, i32) {
    %c0_i32 = arith.constant 0 : i32
    %c0_i32_0 = arith.constant 0 : i32
    return %arg0, %c0_i32 : i32, i32
  }
}

</mosaic_0001>

<llo_original>
// kernel: tpu_custom_call.1
$region0: #{tpu_custom_call.1}
  #allocation0 [shape = 'u32[]', space=smem, size = 0x4, offset = 0x4, fixed_abs, tag = 'smem constant byte address 0x4 - core index']
  #allocation1 [shape = 'u32[144,128]{1,0:T(1,128)}', space=vmem, size = 0x12000, scoped, tag = 'internal scratch']
  %s0 = inlined_call_operand.vmem [shape: f32[16,4096], index: 0, kind: input, shape index: {}]
  %s1 = inlined_call_operand.vmem [shape: f32[4096,64], index: 1, kind: input, shape index: {}]
  %s2 = inlined_call_operand.vmem [shape: f32[1,64], index: 2, kind: input, shape index: {}]
  %s3 = inlined_call_operand.vmem [shape: f32[64,64], index: 3, kind: input, shape index: {}]
  %s4 = inlined_call_operand.vmem [shape: f32[1,64], index: 4, kind: input, shape index: {}]
  %s5 = inlined_call_operand.vmem [shape: f32[1,64], index: 5, kind: input, shape index: {}]
  %s6 = inlined_call_operand.hbm [shape: f32[1,16], index: 6, kind: output, shape index: {}]
  %s7 = sld [smem:[#allocation0]]
  $region34: #{tpu_custom_call.1} parent=0
    _
  %s9 = ssub.s32 1, %s7
  %s10 = scalar_select 0, %s9, %s7
  $region1: #{tpu_custom_call.1} parent=0
    #allocation2 [shape = 'u8[512]{0}', space=vmem, size = 0x400, scoped, tag = 'output window, operand 0, single buffered']
    #allocation3 [shape = 's32[1]{0}', space=sflag, size = 0x4, scoped, tag = 'scoped memory for tpu_custom_call.1']
    %11 = vsyncpa [#allocation3], 0
    // Predicated region
    $region2: #{tpu_custom_call.1} parent=1 // pred_check
      _
    $region3: #{tpu_custom_call.1} parent=1 // pred_check_branch
      %13 = sbr.rel (0) target = $region5
    $region4: #{tpu_custom_call.1} parent=1 // pred_region
      _
    $region5: #{tpu_custom_call.1} parent=1 // pred_fallthru
      _
    // Predicated region
    $region6: #{tpu_custom_call.1} parent=1 // pred_check
      _
    $region7: #{tpu_custom_call.1} parent=1 // pred_check_branch
      %15 = sbr.rel (0) target = $region9
    $region8: #{tpu_custom_call.1} parent=1 // pred_region
      _
    $region9: #{tpu_custom_call.1} parent=1 // pred_fallthru
      _
    // Predicated region
    $region10: #{tpu_custom_call.1} parent=1 // pred_check
      _
    $region11: #{tpu_custom_call.1} parent=1 // pred_check_branch
      %17 = sbr.rel (0) target = $region13
    $region12: #{tpu_custom_call.1} parent=1 // pred_region
      _
    $region13: #{tpu_custom_call.1} parent=1 // pred_fallthru
      _
    // Predicated region
    $region14: #{tpu_custom_call.1} parent=1 // pred_check
      _
    $region15: #{tpu_custom_call.1} parent=1 // pred_check_branch
      %19 = sbr.rel (0) target = $region17
    $region16: #{tpu_custom_call.1} parent=1 // pred_region
      _
    $region17: #{tpu_custom_call.1} parent=1 // pred_fallthru
      _
    // Predicated region
    $region18: #{tpu_custom_call.1} parent=1 // pred_check
      _
    $region19: #{tpu_custom_call.1} parent=1 // pred_check_branch
      %21 = sbr.rel (0) target = $region21
    $region20: #{tpu_custom_call.1} parent=1 // pred_region
      _
    $region21: #{tpu_custom_call.1} parent=1 // pred_fallthru
      _
    // Predicated region
    $region22: #{tpu_custom_call.1} parent=1 // pred_check
      _
    $region23: #{tpu_custom_call.1} parent=1 // pred_check_branch
      %23 = sbr.rel (0) target = $region25
    $region24: #{tpu_custom_call.1} parent=1 // pred_region
      _
    $region25: #{tpu_custom_call.1} parent=1 // pred_fallthru
      _
    %v24 = vld [vmem:[%s0] sm:$0xff]
    %v25 = vld [vmem:[%s0 + $0x8] sm:$0xff]
    %v26 = vld [vmem:[%s0 + $0x10] sm:$0xff]
    %v27 = vld [vmem:[%s0 + $0x18] sm:$0xff]
    %v28 = vld [vmem:[%s0 + $0x20] sm:$0xff]
    %v29 = vld [vmem:[%s0 + $0x28] sm:$0xff]
    %v30 = vld [vmem:[%s0 + $0x30] sm:$0xff]
    %v31 = vld [vmem:[%s0 + $0x38] sm:$0xff]
    %v32 = vld [vmem:[%s0 + $0x40] sm:$0xff]
    %v33 = vld [vmem:[%s0 + $0x48] sm:$0xff]
    %v34 = vld [vmem:[%s0 + $0x50] sm:$0xff]
    %v35 = vld [vmem:[%s0 + $0x58] sm:$0xff]
    %v36 = vld [vmem:[%s0 + $0x60] sm:$0xff]
    %v37 = vld [vmem:[%s0 + $0x68] sm:$0xff]
    %v38 = vld [vmem:[%s0 + $0x70] sm:$0xff]
    %v39 = vld [vmem:[%s0 + $0x78] sm:$0xff]
    %v40 = vld [vmem:[%s0 + $0x80] sm:$0xff]
    %v41 = vld [vmem:[%s0 + $0x88] sm:$0xff]
    %v42 = vld [vmem:[%s0 + $0x90] sm:$0xff]
    %v43 = vld [vmem:[%s0 + $0x98] sm:$0xff]
    %v44 = vld [vmem:[%s0 + $0xa0] sm:$0xff]
    %v45 = vld [vmem:[%s0 + $0xa8] sm:$0xff]
    %v46 = vld [vmem:[%s0 + $0xb0] sm:$0xff]
    %v47 = vld [vmem:[%s0 + $0xb8] sm:$0xff]
    %v48 = vld [vmem:[%s0 + $0xc0] sm:$0xff]
    %v49 = vld [vmem:[%s0 + $0xc8] sm:$0xff]
    %v50 = vld [vmem:[%s0 + $0xd0] sm:$0xff]
    %v51 = vld [vmem:[%s0 + $0xd8] sm:$0xff]
    %v52 = vld [vmem:[%s0 + $0xe0] sm:$0xff]
    %v53 = vld [vmem:[%s0 + $0xe8] sm:$0xff]
    %v54 = vld [vmem:[%s0 + $0xf0] sm:$0xff]
    %v55 = vld [vmem:[%s0 + $0xf8] sm:$0xff]
    %v56 = vld [vmem:[%s0 + $0x100] sm:$0xff]
    %v57 = vld [vmem:[%s0 + $0x108] sm:$0xff]
    %v58 = vld [vmem:[%s0 + $0x110] sm:$0xff]
    %v59 = vld [vmem:[%s0 + $0x118] sm:$0xff]
    %v60 = vld [vmem:[%s0 + $0x120] sm:$0xff]
    %v61 = vld [vmem:[%s0 + $0x128] sm:$0xff]
    %v62 = vld [vmem:[%s0 + $0x130] sm:$0xff]
    %v63 = vld [vmem:[%s0 + $0x138] sm:$0xff]
    %v64 = vld [vmem:[%s0 + $0x140] sm:$0xff]
    %v65 = vld [vmem:[%s0 + $0x148] sm:$0xff]
    %v66 = vld [vmem:[%s0 + $0x150] sm:$0xff]
    %v67 = vld [vmem:[%s0 + $0x158] sm:$0xff]
    %v68 = vld [vmem:[%s0 + $0x160] sm:$0xff]
    %v69 = vld [vmem:[%s0 + $0x168] sm:$0xff]
    %v70 = vld [vmem:[%s0 + $0x170] sm:$0xff]
    %v71 = vld [vmem:[%s0 + $0x178] sm:$0xff]
    %v72 = vld [vmem:[%s0 + $0x180] sm:$0xff]
    %v73 = vld [vmem:[%s0 + $0x188] sm:$0xff]
    %v74 = vld [vmem:[%s0 + $0x190] sm:$0xff]
    %v75 = vld [vmem:[%s0 + $0x198] sm:$0xff]
    %v76 = vld [vmem:[%s0 + $0x1a0] sm:$0xff]
    %v77 = vld [vmem:[%s0 + $0x1a8] sm:$0xff]
    %v78 = vld [vmem:[%s0 + $0x1b0] sm:$0xff]
    %v79 = vld [vmem:[%s0 + $0x1b8] sm:$0xff]
    %v80 = vld [vmem:[%s0 + $0x1c0] sm:$0xff]
    %v81 = vld [vmem:[%s0 + $0x1c8] sm:$0xff]
    %v82 = vld [vmem:[%s0 + $0x1d0] sm:$0xff]
    %v83 = vld [vmem:[%s0 + $0x1d8] sm:$0xff]
    %v84 = vld [vmem:[%s0 + $0x1e0] sm:$0xff]
    %v85 = vld [vmem:[%s0 + $0x1e8] sm:$0xff]
    %v86 = vld [vmem:[%s0 + $0x1f0] sm:$0xff]
    %v87 = vld [vmem:[%s0 + $0x1f8] sm:$0xff]
    %v88 = vld [vmem:[%s1] sm:$0xff]
    %v89 = vld [vmem:[%s1 + $0x8] sm:$0xff]
    %v90 = vld [vmem:[%s1 + $0x10] sm:$0xff]
    %v91 = vld [vmem:[%s1 + $0x18] sm:$0xff]
    %v92 = vld [vmem:[%s1 + $0x20] sm:$0xff]
    %v93 = vld [vmem:[%s1 + $0x28] sm:$0xff]
    %v94 = vld [vmem:[%s1 + $0x30] sm:$0xff]
    %v95 = vld [vmem:[%s1 + $0x38] sm:$0xff]
    %v96 = vld [vmem:[%s1 + $0x40] sm:$0xff]
    %v97 = vld [vmem:[%s1 + $0x48] sm:$0xff]
    %v98 = vld [vmem:[%s1 + $0x50] sm:$0xff]
    %v99 = vld [vmem:[%s1 + $0x58] sm:$0xff]
    %v100 = vld [vmem:[%s1 + $0x60] sm:$0xff]
    %v101 = vld [vmem:[%s1 + $0x68] sm:$0xff]
    %v102 = vld [vmem:[%s1 + $0x70] sm:$0xff]
    %v103 = vld [vmem:[%s1 + $0x78] sm:$0xff]
    %v104 = vld [vmem:[%s1 + $0x80] sm:$0xff]
    %v105 = vld [vmem:[%s1 + $0x88] sm:$0xff]
    %v106 = vld [vmem:[%s1 + $0x90] sm:$0xff]
    %v107 = vld [vmem:[%s1 + $0x98] sm:$0xff]
    %v108 = vld [vmem:[%s1 + $0xa0] sm:$0xff]
    %v109 = vld [vmem:[%s1 + $0xa8] sm:$0xff]
    %v110 = vld [vmem:[%s1 + $0xb0] sm:$0xff]
    %v111 = vld [vmem:[%s1 + $0xb8] sm:$0xff]
    %v112 = vld [vmem:[%s1 + $0xc0] sm:$0xff]
    %v113 = vld [vmem:[%s1 + $0xc8] sm:$0xff]
    %v114 = vld [vmem:[%s1 + $0xd0] sm:$0xff]
    %v115 = vld [vmem:[%s1 + $0xd8] sm:$0xff]
    %v116 = vld [vmem:[%s1 + $0xe0] sm:$0xff]
    %v117 = vld [vmem:[%s1 + $0xe8] sm:$0xff]
    %v118 = vld [vmem:[%s1 + $0xf0] sm:$0xff]
    %v119 = vld [vmem:[%s1 + $0xf8] sm:$0xff]
    %v120 = vld [vmem:[%s1 + $0x100] sm:$0xff]
    %v121 = vld [vmem:[%s1 + $0x108] sm:$0xff]
    %v122 = vld [vmem:[%s1 + $0x110] sm:$0xff]
    %v123 = vld [vmem:[%s1 + $0x118] sm:$0xff]
    %v124 = vld [vmem:[%s1 + $0x120] sm:$0xff]
    %v125 = vld [vmem:[%s1 + $0x128] sm:$0xff]
    %v126 = vld [vmem:[%s1 + $0x130] sm:$0xff]
    %v127 = vld [vmem:[%s1 + $0x138] sm:$0xff]
    %v128 = vld [vmem:[%s1 + $0x140] sm:$0xff]
    %v129 = vld [vmem:[%s1 + $0x148] sm:$0xff]
    %v130 = vld [vmem:[%s1 + $0x150] sm:$0xff]
    %v131 = vld [vmem:[%s1 + $0x158] sm:$0xff]
    %v132 = vld [vmem:[%s1 + $0x160] sm:$0xff]
    %v133 = vld [vmem:[%s1 + $0x168] sm:$0xff]
    %v134 = vld [vmem:[%s1 + $0x170] sm:$0xff]
    %v135 = vld [vmem:[%s1 + $0x178] sm:$0xff]
    %v136 = vld [vmem:[%s1 + $0x180] sm:$0xff]
    %v137 = vld [vmem:[%s1 + $0x188] sm:$0xff]
    %v138 = vld [vmem:[%s1 + $0x190] sm:$0xff]
    %v139 = vld [vmem:[%s1 + $0x198] sm:$0xff]
    %v140 = vld [vmem:[%s1 + $0x1a0] sm:$0xff]
    %v141 = vld [vmem:[%s1 + $0x1a8] sm:$0xff]
    %v142 = vld [vmem:[%s1 + $0x1b0] sm:$0xff]
    %v143 = vld [vmem:[%s1 + $0x1b8] sm:$0xff]
    %v144 = vld [vmem:[%s1 + $0x1c0] sm:$0xff]
    %v145 = vld [vmem:[%s1 + $0x1c8] sm:$0xff]
    %v146 = vld [vmem:[%s1 + $0x1d0] sm:$0xff]
    %v147 = vld [vmem:[%s1 + $0x1d8] sm:$0xff]
    %v148 = vld [vmem:[%s1 + $0x1e0] sm:$0xff]
    %v149 = vld [vmem:[%s1 + $0x1e8] sm:$0xff]
    %v150 = vld [vmem:[%s1 + $0x1f0] sm:$0xff]
    %v151 = vld [vmem:[%s1 + $0x1f8] sm:$0xff]
    %v152 = vld [vmem:[%s1 + $0x200] sm:$0xff]
    %v153 = vld [vmem:[%s1 + $0x208] sm:$0xff]
    %v154 = vld [vmem:[%s1 + $0x210] sm:$0xff]
    %v155 = vld [vmem:[%s1 + $0x218] sm:$0xff]
    %v156 = vld [vmem:[%s1 + $0x220] sm:$0xff]
    %v157 = vld [vmem:[%s1 + $0x228] sm:$0xff]
    %v158 = vld [vmem:[%s1 + $0x230] sm:$0xff]
    %v159 = vld [vmem:[%s1 + $0x238] sm:$0xff]
    %v160 = vld [vmem:[%s1 + $0x240] sm:$0xff]
    %v161 = vld [vmem:[%s1 + $0x248] sm:$0xff]
    %v162 = vld [vmem:[%s1 + $0x250] sm:$0xff]
    %v163 = vld [vmem:[%s1 + $0x258] sm:$0xff]
    %v164 = vld [vmem:[%s1 + $0x260] sm:$0xff]
    %v165 = vld [vmem:[%s1 + $0x268] sm:$0xff]
    %v166 = vld [vmem:[%s1 + $0x270] sm:$0xff]
    %v167 = vld [vmem:[%s1 + $0x278] sm:$0xff]
    %v168 = vld [vmem:[%s1 + $0x280] sm:$0xff]
    %v169 = vld [vmem:[%s1 + $0x288] sm:$0xff]
    %v170 = vld [vmem:[%s1 + $0x290] sm:$0xff]
    %v171 = vld [vmem:[%s1 + $0x298] sm:$0xff]
    %v172 = vld [vmem:[%s1 + $0x2a0] sm:$0xff]
    %v173 = vld [vmem:[%s1 + $0x2a8] sm:$0xff]
    %v174 = vld [vmem:[%s1 + $0x2b0] sm:$0xff]
    %v175 = vld [vmem:[%s1 + $0x2b8] sm:$0xff]
    %v176 = vld [vmem:[%s1 + $0x2c0] sm:$0xff]
    %v177 = vld [vmem:[%s1 + $0x2c8] sm:$0xff]
    %v178 = vld [vmem:[%s1 + $0x2d0] sm:$0xff]
    %v179 = vld [vmem:[%s1 + $0x2d8] sm:$0xff]
    %v180 = vld [vmem:[%s1 + $0x2e0] sm:$0xff]
    %v181 = vld [vmem:[%s1 + $0x2e8] sm:$0xff]
    %v182 = vld [vmem:[%s1 + $0x2f0] sm:$0xff]
    %v183 = vld [vmem:[%s1 + $0x2f8] sm:$0xff]
    %v184 = vld [vmem:[%s1 + $0x300] sm:$0xff]
    %v185 = vld [vmem:[%s1 + $0x308] sm:$0xff]
    %v186 = vld [vmem:[%s1 + $0x310] sm:$0xff]
    %v187 = vld [vmem:[%s1 + $0x318] sm:$0xff]
    %v188 = vld [vmem:[%s1 + $0x320] sm:$0xff]
    %v189 = vld [vmem:[%s1 + $0x328] sm:$0xff]
    %v190 = vld [vmem:[%s1 + $0x330] sm:$0xff]
    %v191 = vld [vmem:[%s1 + $0x338] sm:$0xff]
    %v192 = vld [vmem:[%s1 + $0x340] sm:$0xff]
    %v193 = vld [vmem:[%s1 + $0x348] sm:$0xff]
    %v194 = vld [vmem:[%s1 + $0x350] sm:$0xff]
    %v195 = vld [vmem:[%s1 + $0x358] sm:$0xff]
    %v196 = vld [vmem:[%s1 + $0x360] sm:$0xff]
    %v197 = vld [vmem:[%s1 + $0x368] sm:$0xff]
    %v198 = vld [vmem:[%s1 + $0x370] sm:$0xff]
    %v199 = vld [vmem:[%s1 + $0x378] sm:$0xff]
    %v200 = vld [vmem:[%s1 + $0x380] sm:$0xff]
    %v201 = vld [vmem:[%s1 + $0x388] sm:$0xff]
    %v202 = vld [vmem:[%s1 + $0x390] sm:$0xff]
    %v203 = vld [vmem:[%s1 + $0x398] sm:$0xff]
    %v204 = vld [vmem:[%s1 + $0x3a0] sm:$0xff]
    %v205 = vld [vmem:[%s1 + $0x3a8] sm:$0xff]
    %v206 = vld [vmem:[%s1 + $0x3b0] sm:$0xff]
    %v207 = vld [vmem:[%s1 + $0x3b8] sm:$0xff]
    %v208 = vld [vmem:[%s1 + $0x3c0] sm:$0xff]
    %v209 = vld [vmem:[%s1 + $0x3c8] sm:$0xff]
    %v210 = vld [vmem:[%s1 + $0x3d0] sm:$0xff]
    %v211 = vld [vmem:[%s1 + $0x3d8] sm:$0xff]
    %v212 = vld [vmem:[%s1 + $0x3e0] sm:$0xff]
    %v213 = vld [vmem:[%s1 + $0x3e8] sm:$0xff]
    %v214 = vld [vmem:[%s1 + $0x3f0] sm:$0xff]
    %v215 = vld [vmem:[%s1 + $0x3f8] sm:$0xff]
    %v216 = vld [vmem:[%s1 + $0x400] sm:$0xff]
    %v217 = vld [vmem:[%s1 + $0x408] sm:$0xff]
    %v218 = vld [vmem:[%s1 + $0x410] sm:$0xff]
    %v219 = vld [vmem:[%s1 + $0x418] sm:$0xff]
    %v220 = vld [vmem:[%s1 + $0x420] sm:$0xff]
    %v221 = vld [vmem:[%s1 + $0x428] sm:$0xff]
    %v222 = vld [vmem:[%s1 + $0x430] sm:$0xff]
    %v223 = vld [vmem:[%s1 + $0x438] sm:$0xff]
    %v224 = vld [vmem:[%s1 + $0x440] sm:$0xff]
    %v225 = vld [vmem:[%s1 + $0x448] sm:$0xff]
    %v226 = vld [vmem:[%s1 + $0x450] sm:$0xff]
    %v227 = vld [vmem:[%s1 + $0x458] sm:$0xff]
    %v228 = vld [vmem:[%s1 + $0x460] sm:$0xff]
    %v229 = vld [vmem:[%s1 + $0x468] sm:$0xff]
    %v230 = vld [vmem:[%s1 + $0x470] sm:$0xff]
    %v231 = vld [vmem:[%s1 + $0x478] sm:$0xff]
    %v232 = vld [vmem:[%s1 + $0x480] sm:$0xff]
    %v233 = vld [vmem:[%s1 + $0x488] sm:$0xff]
    %v234 = vld [vmem:[%s1 + $0x490] sm:$0xff]
    %v235 = vld [vmem:[%s1 + $0x498] sm:$0xff]
    %v236 = vld [vmem:[%s1 + $0x4a0] sm:$0xff]
    %v237 = vld [vmem:[%s1 + $0x4a8] sm:$0xff]
    %v238 = vld [vmem:[%s1 + $0x4b0] sm:$0xff]
    %v239 = vld [vmem:[%s1 + $0x4b8] sm:$0xff]
    %v240 = vld [vmem:[%s1 + $0x4c0] sm:$0xff]
    %v241 = vld [vmem:[%s1 + $0x4c8] sm:$0xff]
    %v242 = vld [vmem:[%s1 + $0x4d0] sm:$0xff]
    %v243 = vld [vmem:[%s1 + $0x4d8] sm:$0xff]
    %v244 = vld [vmem:[%s1 + $0x4e0] sm:$0xff]
    %v245 = vld [vmem:[%s1 + $0x4e8] sm:$0xff]
    %v246 = vld [vmem:[%s1 + $0x4f0] sm:$0xff]
    %v247 = vld [vmem:[%s1 + $0x4f8] sm:$0xff]
    %v248 = vld [vmem:[%s1 + $0x500] sm:$0xff]
    %v249 = vld [vmem:[%s1 + $0x508] sm:$0xff]
    %v250 = vld [vmem:[%s1 + $0x510] sm:$0xff]
    %v251 = vld [vmem:[%s1 + $0x518] sm:$0xff]
    %v252 = vld [vmem:[%s1 + $0x520] sm:$0xff]
    %v253 = vld [vmem:[%s1 + $0x528] sm:$0xff]
    %v254 = vld [vmem:[%s1 + $0x530] sm:$0xff]
    %v255 = vld [vmem:[%s1 + $0x538] sm:$0xff]
    %v256 = vld [vmem:[%s1 + $0x540] sm:$0xff]
    %v257 = vld [vmem:[%s1 + $0x548] sm:$0xff]
    %v258 = vld [vmem:[%s1 + $0x550] sm:$0xff]
    %v259 = vld [vmem:[%s1 + $0x558] sm:$0xff]
    %v260 = vld [vmem:[%s1 + $0x560] sm:$0xff]
    %v261 = vld [vmem:[%s1 + $0x568] sm:$0xff]
    %v262 = vld [vmem:[%s1 + $0x570] sm:$0xff]
    %v263 = vld [vmem:[%s1 + $0x578] sm:$0xff]
    %v264 = vld [vmem:[%s1 + $0x580] sm:$0xff]
    %v265 = vld [vmem:[%s1 + $0x588] sm:$0xff]
    %v266 = vld [vmem:[%s1 + $0x590] sm:$0xff]
    %v267 = vld [vmem:[%s1 + $0x598] sm:$0xff]
    %v268 = vld [vmem:[%s1 + $0x5a0] sm:$0xff]
    %v269 = vld [vmem:[%s1 + $0x5a8] sm:$0xff]
    %v270 = vld [vmem:[%s1 + $0x5b0] sm:$0xff]
    %v271 = vld [vmem:[%s1 + $0x5b8] sm:$0xff]
    %v272 = vld [vmem:[%s1 + $0x5c0] sm:$0xff]
    %v273 = vld [vmem:[%s1 + $0x5c8] sm:$0xff]
    %v274 = vld [vmem:[%s1 + $0x5d0] sm:$0xff]
    %v275 = vld [vmem:[%s1 + $0x5d8] sm:$0xff]
    %v276 = vld [vmem:[%s1 + $0x5e0] sm:$0xff]
    %v277 = vld [vmem:[%s1 + $0x5e8] sm:$0xff]
    %v278 = vld [vmem:[%s1 + $0x5f0] sm:$0xff]
    %v279 = vld [vmem:[%s1 + $0x5f8] sm:$0xff]
    %v280 = vld [vmem:[%s1 + $0x600] sm:$0xff]
    %v281 = vld [vmem:[%s1 + $0x608] sm:$0xff]
    %v282 = vld [vmem:[%s1 + $0x610] sm:$0xff]
    %v283 = vld [vmem:[%s1 + $0x618] sm:$0xff]
    %v284 = vld [vmem:[%s1 + $0x620] sm:$0xff]
    %v285 = vld [vmem:[%s1 + $0x628] sm:$0xff]
    %v286 = vld [vmem:[%s1 + $0x630] sm:$0xff]
    %v287 = vld [vmem:[%s1 + $0x638] sm:$0xff]
    %v288 = vld [vmem:[%s1 + $0x640] sm:$0xff]
    %v289 = vld [vmem:[%s1 + $0x648] sm:$0xff]
    %v290 = vld [vmem:[%s1 + $0x650] sm:$0xff]
    %v291 = vld [vmem:[%s1 + $0x658] sm:$0xff]
    %v292 = vld [vmem:[%s1 + $0x660] sm:$0xff]
    %v293 = vld [vmem:[%s1 + $0x668] sm:$0xff]
    %v294 = vld [vmem:[%s1 + $0x670] sm:$0xff]
    %v295 = vld [vmem:[%s1 + $0x678] sm:$0xff]
    %v296 = vld [vmem:[%s1 + $0x680] sm:$0xff]
    %v297 = vld [vmem:[%s1 + $0x688] sm:$0xff]
    %v298 = vld [vmem:[%s1 + $0x690] sm:$0xff]
    %v299 = vld [vmem:[%s1 + $0x698] sm:$0xff]
    %v300 = vld [vmem:[%s1 + $0x6a0] sm:$0xff]
    %v301 = vld [vmem:[%s1 + $0x6a8] sm:$0xff]
    %v302 = vld [vmem:[%s1 + $0x6b0] sm:$0xff]
    %v303 = vld [vmem:[%s1 + $0x6b8] sm:$0xff]
    %v304 = vld [vmem:[%s1 + $0x6c0] sm:$0xff]
    %v305 = vld [vmem:[%s1 + $0x6c8] sm:$0xff]
    %v306 = vld [vmem:[%s1 + $0x6d0] sm:$0xff]
    %v307 = vld [vmem:[%s1 + $0x6d8] sm:$0xff]
    %v308 = vld [vmem:[%s1 + $0x6e0] sm:$0xff]
    %v309 = vld [vmem:[%s1 + $0x6e8] sm:$0xff]
    %v310 = vld [vmem:[%s1 + $0x6f0] sm:$0xff]
    %v311 = vld [vmem:[%s1 + $0x6f8] sm:$0xff]
    %v312 = vld [vmem:[%s1 + $0x700] sm:$0xff]
    %v313 = vld [vmem:[%s1 + $0x708] sm:$0xff]
    %v314 = vld [vmem:[%s1 + $0x710] sm:$0xff]
    %v315 = vld [vmem:[%s1 + $0x718] sm:$0xff]
    %v316 = vld [vmem:[%s1 + $0x720] sm:$0xff]
    %v317 = vld [vmem:[%s1 + $0x728] sm:$0xff]
    %v318 = vld [vmem:[%s1 + $0x730] sm:$0xff]
    %v319 = vld [vmem:[%s1 + $0x738] sm:$0xff]
    %v320 = vld [vmem:[%s1 + $0x740] sm:$0xff]
    %v321 = vld [vmem:[%s1 + $0x748] sm:$0xff]
    %v322 = vld [vmem:[%s1 + $0x750] sm:$0xff]
    %v323 = vld [vmem:[%s1 + $0x758] sm:$0xff]
    %v324 = vld [vmem:[%s1 + $0x760] sm:$0xff]
    %v325 = vld [vmem:[%s1 + $0x768] sm:$0xff]
    %v326 = vld [vmem:[%s1 + $0x770] sm:$0xff]
    %v327 = vld [vmem:[%s1 + $0x778] sm:$0xff]
    %v328 = vld [vmem:[%s1 + $0x780] sm:$0xff]
    %v329 = vld [vmem:[%s1 + $0x788] sm:$0xff]
    %v330 = vld [vmem:[%s1 + $0x790] sm:$0xff]
    %v331 = vld [vmem:[%s1 + $0x798] sm:$0xff]
    %v332 = vld [vmem:[%s1 + $0x7a0] sm:$0xff]
    %v333 = vld [vmem:[%s1 + $0x7a8] sm:$0xff]
    %v334 = vld [vmem:[%s1 + $0x7b0] sm:$0xff]
    %v335 = vld [vmem:[%s1 + $0x7b8] sm:$0xff]
    %v336 = vld [vmem:[%s1 + $0x7c0] sm:$0xff]
    %v337 = vld [vmem:[%s1 + $0x7c8] sm:$0xff]
    %v338 = vld [vmem:[%s1 + $0x7d0] sm:$0xff]
    %v339 = vld [vmem:[%s1 + $0x7d8] sm:$0xff]
    %v340 = vld [vmem:[%s1 + $0x7e0] sm:$0xff]
    %v341 = vld [vmem:[%s1 + $0x7e8] sm:$0xff]
    %v342 = vld [vmem:[%s1 + $0x7f0] sm:$0xff]
    %v343 = vld [vmem:[%s1 + $0x7f8] sm:$0xff]
    %v344 = vld [vmem:[%s1 + $0x800] sm:$0xff]
    %v345 = vld [vmem:[%s1 + $0x808] sm:$0xff]
    %v346 = vld [vmem:[%s1 + $0x810] sm:$0xff]
    %v347 = vld [vmem:[%s1 + $0x818] sm:$0xff]
    %v348 = vld [vmem:[%s1 + $0x820] sm:$0xff]
    %v349 = vld [vmem:[%s1 + $0x828] sm:$0xff]
    %v350 = vld [vmem:[%s1 + $0x830] sm:$0xff]
    %v351 = vld [vmem:[%s1 + $0x838] sm:$0xff]
    %v352 = vld [vmem:[%s1 + $0x840] sm:$0xff]
    %v353 = vld [vmem:[%s1 + $0x848] sm:$0xff]
    %v354 = vld [vmem:[%s1 + $0x850] sm:$0xff]
    %v355 = vld [vmem:[%s1 + $0x858] sm:$0xff]
    %v356 = vld [vmem:[%s1 + $0x860] sm:$0xff]
    %v357 = vld [vmem:[%s1 + $0x868] sm:$0xff]
    %v358 = vld [vmem:[%s1 + $0x870] sm:$0xff]
    %v359 = vld [vmem:[%s1 + $0x878] sm:$0xff]
    %v360 = vld [vmem:[%s1 + $0x880] sm:$0xff]
    %v361 = vld [vmem:[%s1 + $0x888] sm:$0xff]
    %v362 = vld [vmem:[%s1 + $0x890] sm:$0xff]
    %v363 = vld [vmem:[%s1 + $0x898] sm:$0xff]
    %v364 = vld [vmem:[%s1 + $0x8a0] sm:$0xff]
    %v365 = vld [vmem:[%s1 + $0x8a8] sm:$0xff]
    %v366 = vld [vmem:[%s1 + $0x8b0] sm:$0xff]
    %v367 = vld [vmem:[%s1 + $0x8b8] sm:$0xff]
    %v368 = vld [vmem:[%s1 + $0x8c0] sm:$0xff]
    %v369 = vld [vmem:[%s1 + $0x8c8] sm:$0xff]
    %v370 = vld [vmem:[%s1 + $0x8d0] sm:$0xff]
    %v371 = vld [vmem:[%s1 + $0x8d8] sm:$0xff]
    %v372 = vld [vmem:[%s1 + $0x8e0] sm:$0xff]
    %v373 = vld [vmem:[%s1 + $0x8e8] sm:$0xff]
    %v374 = vld [vmem:[%s1 + $0x8f0] sm:$0xff]
    %v375 = vld [vmem:[%s1 + $0x8f8] sm:$0xff]
    %v376 = vld [vmem:[%s1 + $0x900] sm:$0xff]
    %v377 = vld [vmem:[%s1 + $0x908] sm:$0xff]
    %v378 = vld [vmem:[%s1 + $0x910] sm:$0xff]
    %v379 = vld [vmem:[%s1 + $0x918] sm:$0xff]
    %v380 = vld [vmem:[%s1 + $0x920] sm:$0xff]
    %v381 = vld [vmem:[%s1 + $0x928] sm:$0xff]
    %v382 = vld [vmem:[%s1 + $0x930] sm:$0xff]
    %v383 = vld [vmem:[%s1 + $0x938] sm:$0xff]
    %v384 = vld [vmem:[%s1 + $0x940] sm:$0xff]
    %v385 = vld [vmem:[%s1 + $0x948] sm:$0xff]
    %v386 = vld [vmem:[%s1 + $0x950] sm:$0xff]
    %v387 = vld [vmem:[%s1 + $0x958] sm:$0xff]
    %v388 = vld [vmem:[%s1 + $0x960] sm:$0xff]
    %v389 = vld [vmem:[%s1 + $0x968] sm:$0xff]
    %v390 = vld [vmem:[%s1 + $0x970] sm:$0xff]
    %v391 = vld [vmem:[%s1 + $0x978] sm:$0xff]
    %v392 = vld [vmem:[%s1 + $0x980] sm:$0xff]
    %v393 = vld [vmem:[%s1 + $0x988] sm:$0xff]
    %v394 = vld [vmem:[%s1 + $0x990] sm:$0xff]
    %v395 = vld [vmem:[%s1 + $0x998] sm:$0xff]
    %v396 = vld [vmem:[%s1 + $0x9a0] sm:$0xff]
    %v397 = vld [vmem:[%s1 + $0x9a8] sm:$0xff]
    %v398 = vld [vmem:[%s1 + $0x9b0] sm:$0xff]
    %v399 = vld [vmem:[%s1 + $0x9b8] sm:$0xff]
    %v400 = vld [vmem:[%s1 + $0x9c0] sm:$0xff]
    %v401 = vld [vmem:[%s1 + $0x9c8] sm:$0xff]
    %v402 = vld [vmem:[%s1 + $0x9d0] sm:$0xff]
    %v403 = vld [vmem:[%s1 + $0x9d8] sm:$0xff]
    %v404 = vld [vmem:[%s1 + $0x9e0] sm:$0xff]
    %v405 = vld [vmem:[%s1 + $0x9e8] sm:$0xff]
    %v406 = vld [vmem:[%s1 + $0x9f0] sm:$0xff]
    %v407 = vld [vmem:[%s1 + $0x9f8] sm:$0xff]
    %v408 = vld [vmem:[%s1 + $0xa00] sm:$0xff]
    %v409 = vld [vmem:[%s1 + $0xa08] sm:$0xff]
    %v410 = vld [vmem:[%s1 + $0xa10] sm:$0xff]
    %v411 = vld [vmem:[%s1 + $0xa18] sm:$0xff]
    %v412 = vld [vmem:[%s1 + $0xa20] sm:$0xff]
    %v413 = vld [vmem:[%s1 + $0xa28] sm:$0xff]
    %v414 = vld [vmem:[%s1 + $0xa30] sm:$0xff]
    %v415 = vld [vmem:[%s1 + $0xa38] sm:$0xff]
    %v416 = vld [vmem:[%s1 + $0xa40] sm:$0xff]
    %v417 = vld [vmem:[%s1 + $0xa48] sm:$0xff]
    %v418 = vld [vmem:[%s1 + $0xa50] sm:$0xff]
    %v419 = vld [vmem:[%s1 + $0xa58] sm:$0xff]
    %v420 = vld [vmem:[%s1 + $0xa60] sm:$0xff]
    %v421 = vld [vmem:[%s1 + $0xa68] sm:$0xff]
    %v422 = vld [vmem:[%s1 + $0xa70] sm:$0xff]
    %v423 = vld [vmem:[%s1 + $0xa78] sm:$0xff]
    %v424 = vld [vmem:[%s1 + $0xa80] sm:$0xff]
    %v425 = vld [vmem:[%s1 + $0xa88] sm:$0xff]
    %v426 = vld [vmem:[%s1 + $0xa90] sm:$0xff]
    %v427 = vld [vmem:[%s1 + $0xa98] sm:$0xff]
    %v428 = vld [vmem:[%s1 + $0xaa0] sm:$0xff]
    %v429 = vld [vmem:[%s1 + $0xaa8] sm:$0xff]
    %v430 = vld [vmem:[%s1 + $0xab0] sm:$0xff]
    %v431 = vld [vmem:[%s1 + $0xab8] sm:$0xff]
    %v432 = vld [vmem:[%s1 + $0xac0] sm:$0xff]
    %v433 = vld [vmem:[%s1 + $0xac8] sm:$0xff]
    %v434 = vld [vmem:[%s1 + $0xad0] sm:$0xff]
    %v435 = vld [vmem:[%s1 + $0xad8] sm:$0xff]
    %v436 = vld [vmem:[%s1 + $0xae0] sm:$0xff]
    %v437 = vld [vmem:[%s1 + $0xae8] sm:$0xff]
    %v438 = vld [vmem:[%s1 + $0xaf0] sm:$0xff]
    %v439 = vld [vmem:[%s1 + $0xaf8] sm:$0xff]
    %v440 = vld [vmem:[%s1 + $0xb00] sm:$0xff]
    %v441 = vld [vmem:[%s1 + $0xb08] sm:$0xff]
    %v442 = vld [vmem:[%s1 + $0xb10] sm:$0xff]
    %v443 = vld [vmem:[%s1 + $0xb18] sm:$0xff]
    %v444 = vld [vmem:[%s1 + $0xb20] sm:$0xff]
    %v445 = vld [vmem:[%s1 + $0xb28] sm:$0xff]
    %v446 = vld [vmem:[%s1 + $0xb30] sm:$0xff]
    %v447 = vld [vmem:[%s1 + $0xb38] sm:$0xff]
    %v448 = vld [vmem:[%s1 + $0xb40] sm:$0xff]
    %v449 = vld [vmem:[%s1 + $0xb48] sm:$0xff]
    %v450 = vld [vmem:[%s1 + $0xb50] sm:$0xff]
    %v451 = vld [vmem:[%s1 + $0xb58] sm:$0xff]
    %v452 = vld [vmem:[%s1 + $0xb60] sm:$0xff]
    %v453 = vld [vmem:[%s1 + $0xb68] sm:$0xff]
    %v454 = vld [vmem:[%s1 + $0xb70] sm:$0xff]
    %v455 = vld [vmem:[%s1 + $0xb78] sm:$0xff]
    %v456 = vld [vmem:[%s1 + $0xb80] sm:$0xff]
    %v457 = vld [vmem:[%s1 + $0xb88] sm:$0xff]
    %v458 = vld [vmem:[%s1 + $0xb90] sm:$0xff]
    %v459 = vld [vmem:[%s1 + $0xb98] sm:$0xff]
    %v460 = vld [vmem:[%s1 + $0xba0] sm:$0xff]
    %v461 = vld [vmem:[%s1 + $0xba8] sm:$0xff]
    %v462 = vld [vmem:[%s1 + $0xbb0] sm:$0xff]
    %v463 = vld [vmem:[%s1 + $0xbb8] sm:$0xff]
    %v464 = vld [vmem:[%s1 + $0xbc0] sm:$0xff]
    %v465 = vld [vmem:[%s1 + $0xbc8] sm:$0xff]
    %v466 = vld [vmem:[%s1 + $0xbd0] sm:$0xff]
    %v467 = vld [vmem:[%s1 + $0xbd8] sm:$0xff]
    %v468 = vld [vmem:[%s1 + $0xbe0] sm:$0xff]
    %v469 = vld [vmem:[%s1 + $0xbe8] sm:$0xff]
    %v470 = vld [vmem:[%s1 + $0xbf0] sm:$0xff]
    %v471 = vld [vmem:[%s1 + $0xbf8] sm:$0xff]
    %v472 = vld [vmem:[%s1 + $0xc00] sm:$0xff]
    %v473 = vld [vmem:[%s1 + $0xc08] sm:$0xff]
    %v474 = vld [vmem:[%s1 + $0xc10] sm:$0xff]
    %v475 = vld [vmem:[%s1 + $0xc18] sm:$0xff]
    %v476 = vld [vmem:[%s1 + $0xc20] sm:$0xff]
    %v477 = vld [vmem:[%s1 + $0xc28] sm:$0xff]
    %v478 = vld [vmem:[%s1 + $0xc30] sm:$0xff]
    %v479 = vld [vmem:[%s1 + $0xc38] sm:$0xff]
    %v480 = vld [vmem:[%s1 + $0xc40] sm:$0xff]
    %v481 = vld [vmem:[%s1 + $0xc48] sm:$0xff]
    %v482 = vld [vmem:[%s1 + $0xc50] sm:$0xff]
    %v483 = vld [vmem:[%s1 + $0xc58] sm:$0xff]
    %v484 = vld [vmem:[%s1 + $0xc60] sm:$0xff]
    %v485 = vld [vmem:[%s1 + $0xc68] sm:$0xff]
    %v486 = vld [vmem:[%s1 + $0xc70] sm:$0xff]
    %v487 = vld [vmem:[%s1 + $0xc78] sm:$0xff]
    %v488 = vld [vmem:[%s1 + $0xc80] sm:$0xff]
    %v489 = vld [vmem:[%s1 + $0xc88] sm:$0xff]
    %v490 = vld [vmem:[%s1 + $0xc90] sm:$0xff]
    %v491 = vld [vmem:[%s1 + $0xc98] sm:$0xff]
    %v492 = vld [vmem:[%s1 + $0xca0] sm:$0xff]
    %v493 = vld [vmem:[%s1 + $0xca8] sm:$0xff]
    %v494 = vld [vmem:[%s1 + $0xcb0] sm:$0xff]
    %v495 = vld [vmem:[%s1 + $0xcb8] sm:$0xff]
    %v496 = vld [vmem:[%s1 + $0xcc0] sm:$0xff]
    %v497 = vld [vmem:[%s1 + $0xcc8] sm:$0xff]
    %v498 = vld [vmem:[%s1 + $0xcd0] sm:$0xff]
    %v499 = vld [vmem:[%s1 + $0xcd8] sm:$0xff]
    %v500 = vld [vmem:[%s1 + $0xce0] sm:$0xff]
    %v501 = vld [vmem:[%s1 + $0xce8] sm:$0xff]
    %v502 = vld [vmem:[%s1 + $0xcf0] sm:$0xff]
    %v503 = vld [vmem:[%s1 + $0xcf8] sm:$0xff]
    %v504 = vld [vmem:[%s1 + $0xd00] sm:$0xff]
    %v505 = vld [vmem:[%s1 + $0xd08] sm:$0xff]
    %v506 = vld [vmem:[%s1 + $0xd10] sm:$0xff]
    %v507 = vld [vmem:[%s1 + $0xd18] sm:$0xff]
    %v508 = vld [vmem:[%s1 + $0xd20] sm:$0xff]
    %v509 = vld [vmem:[%s1 + $0xd28] sm:$0xff]
    %v510 = vld [vmem:[%s1 + $0xd30] sm:$0xff]
    %v511 = vld [vmem:[%s1 + $0xd38] sm:$0xff]
    %v512 = vld [vmem:[%s1 + $0xd40] sm:$0xff]
    %v513 = vld [vmem:[%s1 + $0xd48] sm:$0xff]
    %v514 = vld [vmem:[%s1 + $0xd50] sm:$0xff]
    %v515 = vld [vmem:[%s1 + $0xd58] sm:$0xff]
    %v516 = vld [vmem:[%s1 + $0xd60] sm:$0xff]
    %v517 = vld [vmem:[%s1 + $0xd68] sm:$0xff]
    %v518 = vld [vmem:[%s1 + $0xd70] sm:$0xff]
    %v519 = vld [vmem:[%s1 + $0xd78] sm:$0xff]
    %v520 = vld [vmem:[%s1 + $0xd80] sm:$0xff]
    %v521 = vld [vmem:[%s1 + $0xd88] sm:$0xff]
    %v522 = vld [vmem:[%s1 + $0xd90] sm:$0xff]
    %v523 = vld [vmem:[%s1 + $0xd98] sm:$0xff]
    %v524 = vld [vmem:[%s1 + $0xda0] sm:$0xff]
    %v525 = vld [vmem:[%s1 + $0xda8] sm:$0xff]
    %v526 = vld [vmem:[%s1 + $0xdb0] sm:$0xff]
    %v527 = vld [vmem:[%s1 + $0xdb8] sm:$0xff]
    %v528 = vld [vmem:[%s1 + $0xdc0] sm:$0xff]
    %v529 = vld [vmem:[%s1 + $0xdc8] sm:$0xff]
    %v530 = vld [vmem:[%s1 + $0xdd0] sm:$0xff]
    %v531 = vld [vmem:[%s1 + $0xdd8] sm:$0xff]
    %v532 = vld [vmem:[%s1 + $0xde0] sm:$0xff]
    %v533 = vld [vmem:[%s1 + $0xde8] sm:$0xff]
    %v534 = vld [vmem:[%s1 + $0xdf0] sm:$0xff]
    %v535 = vld [vmem:[%s1 + $0xdf8] sm:$0xff]
    %v536 = vld [vmem:[%s1 + $0xe00] sm:$0xff]
    %v537 = vld [vmem:[%s1 + $0xe08] sm:$0xff]
    %v538 = vld [vmem:[%s1 + $0xe10] sm:$0xff]
    %v539 = vld [vmem:[%s1 + $0xe18] sm:$0xff]
    %v540 = vld [vmem:[%s1 + $0xe20] sm:$0xff]
    %v541 = vld [vmem:[%s1 + $0xe28] sm:$0xff]
    %v542 = vld [vmem:[%s1 + $0xe30] sm:$0xff]
    %v543 = vld [vmem:[%s1 + $0xe38] sm:$0xff]
    %v544 = vld [vmem:[%s1 + $0xe40] sm:$0xff]
    %v545 = vld [vmem:[%s1 + $0xe48] sm:$0xff]
    %v546 = vld [vmem:[%s1 + $0xe50] sm:$0xff]
    %v547 = vld [vmem:[%s1 + $0xe58] sm:$0xff]
    %v548 = vld [vmem:[%s1 + $0xe60] sm:$0xff]
    %v549 = vld [vmem:[%s1 + $0xe68] sm:$0xff]
    %v550 = vld [vmem:[%s1 + $0xe70] sm:$0xff]
    %v551 = vld [vmem:[%s1 + $0xe78] sm:$0xff]
    %v552 = vld [vmem:[%s1 + $0xe80] sm:$0xff]
    %v553 = vld [vmem:[%s1 + $0xe88] sm:$0xff]
    %v554 = vld [vmem:[%s1 + $0xe90] sm:$0xff]
    %v555 = vld [vmem:[%s1 + $0xe98] sm:$0xff]
    %v556 = vld [vmem:[%s1 + $0xea0] sm:$0xff]
    %v557 = vld [vmem:[%s1 + $0xea8] sm:$0xff]
    %v558 = vld [vmem:[%s1 + $0xeb0] sm:$0xff]
    %v559 = vld [vmem:[%s1 + $0xeb8] sm:$0xff]
    %v560 = vld [vmem:[%s1 + $0xec0] sm:$0xff]
    %v561 = vld [vmem:[%s1 + $0xec8] sm:$0xff]
    %v562 = vld [vmem:[%s1 + $0xed0] sm:$0xff]
    %v563 = vld [vmem:[%s1 + $0xed8] sm:$0xff]
    %v564 = vld [vmem:[%s1 + $0xee0] sm:$0xff]
    %v565 = vld [vmem:[%s1 + $0xee8] sm:$0xff]
    %v566 = vld [vmem:[%s1 + $0xef0] sm:$0xff]
    %v567 = vld [vmem:[%s1 + $0xef8] sm:$0xff]
    %v568 = vld [vmem:[%s1 + $0xf00] sm:$0xff]
    %v569 = vld [vmem:[%s1 + $0xf08] sm:$0xff]
    %v570 = vld [vmem:[%s1 + $0xf10] sm:$0xff]
    %v571 = vld [vmem:[%s1 + $0xf18] sm:$0xff]
    %v572 = vld [vmem:[%s1 + $0xf20] sm:$0xff]
    %v573 = vld [vmem:[%s1 + $0xf28] sm:$0xff]
    %v574 = vld [vmem:[%s1 + $0xf30] sm:$0xff]
    %v575 = vld [vmem:[%s1 + $0xf38] sm:$0xff]
    %v576 = vld [vmem:[%s1 + $0xf40] sm:$0xff]
    %v577 = vld [vmem:[%s1 + $0xf48] sm:$0xff]
    %v578 = vld [vmem:[%s1 + $0xf50] sm:$0xff]
    %v579 = vld [vmem:[%s1 + $0xf58] sm:$0xff]
    %v580 = vld [vmem:[%s1 + $0xf60] sm:$0xff]
    %v581 = vld [vmem:[%s1 + $0xf68] sm:$0xff]
    %v582 = vld [vmem:[%s1 + $0xf70] sm:$0xff]
    %v583 = vld [vmem:[%s1 + $0xf78] sm:$0xff]
    %v584 = vld [vmem:[%s1 + $0xf80] sm:$0xff]
    %v585 = vld [vmem:[%s1 + $0xf88] sm:$0xff]
    %v586 = vld [vmem:[%s1 + $0xf90] sm:$0xff]
    %v587 = vld [vmem:[%s1 + $0xf98] sm:$0xff]
    %v588 = vld [vmem:[%s1 + $0xfa0] sm:$0xff]
    %v589 = vld [vmem:[%s1 + $0xfa8] sm:$0xff]
    %v590 = vld [vmem:[%s1 + $0xfb0] sm:$0xff]
    %v591 = vld [vmem:[%s1 + $0xfb8] sm:$0xff]
    %v592 = vld [vmem:[%s1 + $0xfc0] sm:$0xff]
    %v593 = vld [vmem:[%s1 + $0xfc8] sm:$0xff]
    %v594 = vld [vmem:[%s1 + $0xfd0] sm:$0xff]
    %v595 = vld [vmem:[%s1 + $0xfd8] sm:$0xff]
    %v596 = vld [vmem:[%s1 + $0xfe0] sm:$0xff]
    %v597 = vld [vmem:[%s1 + $0xfe8] sm:$0xff]
    %v598 = vld [vmem:[%s1 + $0xff0] sm:$0xff]
    %v599 = vld [vmem:[%s1 + $0xff8] sm:$0xff]
    %v600 = vld [vmem:[%s2] sm:$0x1]
    %v602 = vlaneseq
    %v603 = vshrl.u32 %v602, 7
    %v604 = vsub.s32 0, %v603
    %v605 = vrot.slane %v600, %v604
    %607 = vmatprep.subr.mxu0 0.0
    %608 = vmatpush1.msra.mxu0 %v88
    %609 = vmatprep.subr.mxu0 0.0
    %610 = vmatpush1.msra.mxu0 %v89
    %611 = vmatprep.subr.mxu0 0.0
    %612 = vmatpush1.msra.mxu0 %v90
    %613 = vmatprep.subr.mxu0 0.0
    %614 = vmatpush1.msra.mxu0 %v91
    %615 = vmatprep.subr.mxu0 0.0
    %616 = vmatpush1.msra.mxu0 %v92
    %617 = vmatprep.subr.mxu0 0.0
    %618 = vmatpush1.msra.mxu0 %v93
    %619 = vmatprep.subr.mxu0 0.0
    %620 = vmatpush1.msra.mxu0 %v94
    %621 = vmatprep.subr.mxu0 0.0
    %622 = vmatpush1.msra.mxu0 %v95
    %623 = vmatprep.subr.mxu0 0.0
    %624 = vmatpush1.msra.mxu0 %v96
    %625 = vmatprep.subr.mxu0 0.0
    %626 = vmatpush1.msra.mxu0 %v97
    %627 = vmatprep.subr.mxu0 0.0
    %628 = vmatpush1.msra.mxu0 %v98
    %629 = vmatprep.subr.mxu0 0.0
    %630 = vmatpush1.msra.mxu0 %v99
    %631 = vmatprep.subr.mxu0 0.0
    %632 = vmatpush1.msra.mxu0 %v100
    %633 = vmatprep.subr.mxu0 0.0
    %634 = vmatpush1.msra.mxu0 %v101
    %635 = vmatprep.subr.mxu0 0.0
    %636 = vmatpush1.msra.mxu0 %v102
    %637 = vmatprep.subr.mxu0 0.0
    %638 = vmatpush1.msra.mxu0 %v103
    %639 = vmatprep.subr.mxu0 0.0
    %640 = vmatpush1.msra.mxu0 %v104
    %641 = vmatprep.subr.mxu0 0.0
    %642 = vmatpush1.msra.mxu0 %v105
    %643 = vmatprep.subr.mxu0 0.0
    %644 = vmatpush1.msra.mxu0 %v106
    %645 = vmatprep.subr.mxu0 0.0
    %646 = vmatpush1.msra.mxu0 %v107
    %647 = vmatprep.subr.mxu0 0.0
    %648 = vmatpush1.msra.mxu0 %v108
    %649 = vmatprep.subr.mxu0 0.0
    %650 = vmatpush1.msra.mxu0 %v109
    %651 = vmatprep.subr.mxu0 0.0
    %652 = vmatpush1.msra.mxu0 %v110
    %653 = vmatprep.subr.mxu0 0.0
    %654 = vmatpush1.msra.mxu0 %v111
    %655 = vmatprep.subr.mxu0 0.0
    %656 = vmatpush1.msra.mxu0 %v112
    %657 = vmatprep.subr.mxu0 0.0
    %658 = vmatpush1.msra.mxu0 %v113
    %659 = vmatprep.subr.mxu0 0.0
    %660 = vmatpush1.msra.mxu0 %v114
    %661 = vmatprep.subr.mxu0 0.0
    %662 = vmatpush1.msra.mxu0 %v115
    %663 = vmatprep.subr.mxu0 0.0
    %664 = vmatpush1.msra.mxu0 %v116
    %665 = vmatprep.subr.mxu0 0.0
    %666 = vmatpush1.msra.mxu0 %v117
    %667 = vmatprep.subr.mxu0 0.0
    %668 = vmatpush1.msra.mxu0 %v118
    %669 = vmatprep.subr.mxu0 0.0
    %670 = vmatpush1.msra.mxu0 %v119
    %671 = vmatprep.mubr.f32.mxu0 %v25
    %672 = vmatmul.mubr.f32.gmra.mrb[0].mxu0 %v24
    %v673 = vpop.f32.mrb[0].mxu0
    %v674 = vadd.f32 %v605, %v673
    %v675 = vpop.f32.mrb[0].mxu0
    %676 = vmatprep.mubr.f32.mxu0 %v57
    %677 = vmatmul.mubr.f32.gmra.mrb[0].mxu0 %v56
    %v678 = vpop.f32.mrb[0].mxu0
    %v679 = vadd.f32 %v605, %v678
    %v680 = vpop.f32.mrb[0].mxu0
    %681 = vdwg.mxu0
    %682 = vmatprep.subr.mxu0 0.0
    %683 = vmatpush1.msra.mxu0 %v120
    %684 = vmatprep.subr.mxu0 0.0
    %685 = vmatpush1.msra.mxu0 %v121
    %686 = vmatprep.subr.mxu0 0.0
    %687 = vmatpush1.msra.mxu0 %v122
    %688 = vmatprep.subr.mxu0 0.0
    %689 = vmatpush1.msra.mxu0 %v123
    %690 = vmatprep.subr.mxu0 0.0
    %691 = vmatpush1.msra.mxu0 %v124
    %692 = vmatprep.subr.mxu0 0.0
    %693 = vmatpush1.msra.mxu0 %v125
    %694 = vmatprep.subr.mxu0 0.0
    %695 = vmatpush1.msra.mxu0 %v126
    %696 = vmatprep.subr.mxu0 0.0
    %697 = vmatpush1.msra.mxu0 %v127
    %698 = vmatprep.subr.mxu0 0.0
    %699 = vmatpush1.msra.mxu0 %v128
    %700 = vmatprep.subr.mxu0 0.0
    %701 = vmatpush1.msra.mxu0 %v129
    %702 = vmatprep.subr.mxu0 0.0
    %703 = vmatpush1.msra.mxu0 %v130
    %704 = vmatprep.subr.mxu0 0.0
    %705 = vmatpush1.msra.mxu0 %v131
    %706 = vmatprep.subr.mxu0 0.0
    %707 = vmatpush1.msra.mxu0 %v132
    %708 = vmatprep.subr.mxu0 0.0
    %709 = vmatpush1.msra.mxu0 %v133
    %710 = vmatprep.subr.mxu0 0.0
    %711 = vmatpush1.msra.mxu0 %v134
    %712 = vmatprep.subr.mxu0 0.0
    %713 = vmatpush1.msra.mxu0 %v135
    %714 = vmatprep.subr.mxu0 0.0
    %715 = vmatpush1.msra.mxu0 %v136
    %716 = vmatprep.subr.mxu0 0.0
    %717 = vmatpush1.msra.mxu0 %v137
    %718 = vmatprep.subr.mxu0 0.0
    %719 = vmatpush1.msra.mxu0 %v138
    %720 = vmatprep.subr.mxu0 0.0
    %721 = vmatpush1.msra.mxu0 %v139
    %722 = vmatprep.subr.mxu0 0.0
    %723 = vmatpush1.msra.mxu0 %v140
    %724 = vmatprep.subr.mxu0 0.0
    %725 = vmatpush1.msra.mxu0 %v141
    %726 = vmatprep.subr.mxu0 0.0
    %727 = vmatpush1.msra.mxu0 %v142
    %728 = vmatprep.subr.mxu0 0.0
    %729 = vmatpush1.msra.mxu0 %v143
    %730 = vmatprep.subr.mxu0 0.0
    %731 = vmatpush1.msra.mxu0 %v144
    %732 = vmatprep.subr.mxu0 0.0
    %733 = vmatpush1.msra.mxu0 %v145
    %734 = vmatprep.subr.mxu0 0.0
    %735 = vmatpush1.msra.mxu0 %v146
    %736 = vmatprep.subr.mxu0 0.0
    %737 = vmatpush1.msra.mxu0 %v147
    %738 = vmatprep.subr.mxu0 0.0
    %739 = vmatpush1.msra.mxu0 %v148
    %740 = vmatprep.subr.mxu0 0.0
    %741 = vmatpush1.msra.mxu0 %v149
    %742 = vmatprep.subr.mxu0 0.0
    %743 = vmatpush1.msra.mxu0 %v150
    %744 = vmatprep.subr.mxu0 0.0
    %745 = vmatpush1.msra.mxu0 %v151
    %746 = vmatprep.mubr.f32.mxu0 %v27
    %747 = vmatmul.mubr.f32.gmra.mrb[0].mxu0 %v26
    %v748 = vpop.f32.mrb[0].mxu0
    %v749 = vadd.f32 %v674, %v748
    %v750 = vpop.f32.mrb[0].mxu0
    %751 = vmatprep.mubr.f32.mxu0 %v59
    %752 = vmatmul.mubr.f32.gmra.mrb[0].mxu0 %v58
    %v753 = vpop.f32.mrb[0].mxu0
    %v754 = vadd.f32 %v679, %v753
    %v755 = vpop.f32.mrb[0].mxu0
    %756 = vdwg.mxu0
    %757 = vmatprep.subr.mxu0 0.0
    %758 = vmatpush1.msra.mxu0 %v152
    %759 = vmatprep.subr.mxu0 0.0
    %760 = vmatpush1.msra.mxu0 %v153
    %761 = vmatprep.subr.mxu0 0.0
    %762 = vmatpush1.msra.mxu0 %v154
    %763 = vmatprep.subr.mxu0 0.0
    %764 = vmatpush1.msra.mxu0 %v155
    %765 = vmatprep.subr.mxu0 0.0
    %766 = vmatpush1.msra.mxu0 %v156
    %767 = vmatprep.subr.mxu0 0.0
    %768 = vmatpush1.msra.mxu0 %v157
    %769 = vmatprep.subr.mxu0 0.0
    %770 = vmatpush1.msra.mxu0 %v158
    %771 = vmatprep.subr.mxu0 0.0
    %772 = vmatpush1.msra.mxu0 %v159
    %773 = vmatprep.subr.mxu0 0.0
    %774 = vmatpush1.msra.mxu0 %v160
    %775 = vmatprep.subr.mxu0 0.0
    %776 = vmatpush1.msra.mxu0 %v161
    %777 = vmatprep.subr.mxu0 0.0
    %778 = vmatpush1.msra.mxu0 %v162
    %779 = vmatprep.subr.mxu0 0.0
    %780 = vmatpush1.msra.mxu0 %v163
    %781 = vmatprep.subr.mxu0 0.0
    %782 = vmatpush1.msra.mxu0 %v164
    %783 = vmatprep.subr.mxu0 0.0
    %784 = vmatpush1.msra.mxu0 %v165
    %785 = vmatprep.subr.mxu0 0.0
    %786 = vmatpush1.msra.mxu0 %v166
    %787 = vmatprep.subr.mxu0 0.0
    %788 = vmatpush1.msra.mxu0 %v167
    %789 = vmatprep.subr.mxu0 0.0
    %790 = vmatpush1.msra.mxu0 %v168
    %791 = vmatprep.subr.mxu0 0.0
    %792 = vmatpush1.msra.mxu0 %v169
    %793 = vmatprep.subr.mxu0 0.0
    %794 = vmatpush1.msra.mxu0 %v170
    %795 = vmatprep.subr.mxu0 0.0
    %796 = vmatpush1.msra.mxu0 %v171
    %797 = vmatprep.subr.mxu0 0.0
    %798 = vmatpush1.msra.mxu0 %v172
    %799 = vmatprep.subr.mxu0 0.0
    %800 = vmatpush1.msra.mxu0 %v173
    %801 = vmatprep.subr.mxu0 0.0
    %802 = vmatpush1.msra.mxu0 %v174
    %803 = vmatprep.subr.mxu0 0.0
    %804 = vmatpush1.msra.mxu0 %v175
    %805 = vmatprep.subr.mxu0 0.0
    %806 = vmatpush1.msra.mxu0 %v176
    %807 = vmatprep.subr.mxu0 0.0
    %808 = vmatpush1.msra.mxu0 %v177
    %809 = vmatprep.subr.mxu0 0.0
    %810 = vmatpush1.msra.mxu0 %v178
    %811 = vmatprep.subr.mxu0 0.0
    %812 = vmatpush1.msra.mxu0 %v179
    %813 = vmatprep.subr.mxu0 0.0
    %814 = vmatpush1.msra.mxu0 %v180
    %815 = vmatprep.subr.mxu0 0.0
    %816 = vmatpush1.msra.mxu0 %v181
    %817 = vmatprep.subr.mxu0 0.0
    %818 = vmatpush1.msra.mxu0 %v182
    %819 = vmatprep.subr.mxu0 0.0
    %820 = vmatpush1.msra.mxu0 %v183
    %821 = vmatprep.mubr.f32.mxu0 %v29
    %822 = vmatmul.mubr.f32.gmra.mrb[0].mxu0 %v28
    %v823 = vpop.f32.mrb[0].mxu0
    %v824 = vadd.f32 %v749, %v823
    %v825 = vpop.f32.mrb[0].mxu0
    %826 = vmatprep.mubr.f32.mxu0 %v61
    %827 = vmatmul.mubr.f32.gmra.mrb[0].mxu0 %v60
    %v828 = vpop.f32.mrb[0].mxu0
    %v829 = vadd.f32 %v754, %v828
    %v830 = vpop.f32.mrb[0].mxu0
    %831 = vdwg.mxu0
    %832 = vmatprep.subr.mxu0 0.0
    %833 = vmatpush1.msra.mxu0 %v184
    %834 = vmatprep.subr.mxu0 0.0
    %835 = vmatpush1.msra.mxu0 %v185
    %836 = vmatprep.subr.mxu0 0.0
    %837 = vmatpush1.msra.mxu0 %v186
    %838 = vmatprep.subr.mxu0 0.0
    %839 = vmatpush1.msra.mxu0 %v187
    %840 = vmatprep.subr.mxu0 0.0
    %841 = vmatpush1.msra.mxu0 %v188
    %842 = vmatprep.subr.mxu0 0.0
    %843 = vmatpush1.msra.mxu0 %v189
    %844 = vmatprep.subr.mxu0 0.0
    %845 = vmatpush1.msra.mxu0 %v190
    %846 = vmatprep.subr.mxu0 0.0
    %847 = vmatpush1.msra.mxu0 %v191
    %848 = vmatprep.subr.mxu0 0.0
    %849 = vmatpush1.msra.mxu0 %v192
    %850 = vmatprep.subr.mxu0 0.0
    %851 = vmatpush1.msra.mxu0 %v193
    %852 = vmatprep.subr.mxu0 0.0
    %853 = vmatpush1.msra.mxu0 %v194
    %854 = vmatprep.subr.mxu0 0.0
    %855 = vmatpush1.msra.mxu0 %v195
    %856 = vmatprep.subr.mxu0 0.0
    %857 = vmatpush1.msra.mxu0 %v196
    %858 = vmatprep.subr.mxu0 0.0
    %859 = vmatpush1.msra.mxu0 %v197
    %860 = vmatprep.subr.mxu0 0.0
    %861 = vmatpush1.msra.mxu0 %v198
    %862 = vmatprep.subr.mxu0 0.0
    %863 = vmatpush1.msra.mxu0 %v199
    %864 = vmatprep.subr.mxu0 0.0
    %865 = vmatpush1.msra.mxu0 %v200
    %866 = vmatprep.subr.mxu0 0.0
    %867 = vmatpush1.msra.mxu0 %v201
    %868 = vmatprep.subr.mxu0 0.0
    %869 = vmatpush1.msra.mxu0 %v202
    %870 = vmatprep.subr.mxu0 0.0
    %871 = vmatpush1.msra.mxu0 %v203
    %872 = vmatprep.subr.mxu0 0.0
    %873 = vmatpush1.msra.mxu0 %v204
    %874 = vmatprep.subr.mxu0 0.0
    %875 = vmatpush1.msra.mxu0 %v205
    %876 = vmatprep.subr.mxu0 0.0
    %877 = vmatpush1.msra.mxu0 %v206
    %878 = vmatprep.subr.mxu0 0.0
    %879 = vmatpush1.msra.mxu0 %v207
    %880 = vmatprep.subr.mxu0 0.0
    %881 = vmatpush1.msra.mxu0 %v208
    %882 = vmatprep.subr.mxu0 0.0
    %883 = vmatpush1.msra.mxu0 %v209
    %884 = vmatprep.subr.mxu0 0.0
    %885 = vmatpush1.msra.mxu0 %v210
    %886 = vmatprep.subr.mxu0 0.0
    %887 = vmatpush1.msra.mxu0 %v211
    %888 = vmatprep.subr.mxu0 0.0
    %889 = vmatpush1.msra.mxu0 %v212
    %890 = vmatprep.subr.mxu0 0.0
    %891 = vmatpush1.msra.mxu0 %v213
    %892 = vmatprep.subr.mxu0 0.0
    %893 = vmatpush1.msra.mxu0 %v214
    %894 = vmatprep.subr.mxu0 0.0
    %895 = vmatpush1.msra.mxu0 %v215
    %896 = vmatprep.mubr.f32.mxu0 %v31
    %897 = vmatmul.mubr.f32.gmra.mrb[0].mxu0 %v30
    %v898 = vpop.f32.mrb[0].mxu0
    %v899 = vadd.f32 %v824, %v898
    %v900 = vpop.f32.mrb[0].mxu0
    %901 = vmatprep.mubr.f32.mxu0 %v63
    %902 = vmatmul.mubr.f32.gmra.mrb[0].mxu0 %v62
    %v903 = vpop.f32.mrb[0].mxu0
    %v904 = vadd.f32 %v829, %v903
    %v905 = vpop.f32.mrb[0].mxu0
    %906 = vdwg.mxu0
    %907 = vmatprep.subr.mxu0 0.0
    %908 = vmatpush1.msra.mxu0 %v216
    %909 = vmatprep.subr.mxu0 0.0
    %910 = vmatpush1.msra.mxu0 %v217
    %911 = vmatprep.subr.mxu0 0.0
    %912 = vmatpush1.msra.mxu0 %v218
    %913 = vmatprep.subr.mxu0 0.0
    %914 = vmatpush1.msra.mxu0 %v219
    %915 = vmatprep.subr.mxu0 0.0
    %916 = vmatpush1.msra.mxu0 %v220
    %917 = vmatprep.subr.mxu0 0.0
    %918 = vmatpush1.msra.mxu0 %v221
    %919 = vmatprep.subr.mxu0 0.0
    %920 = vmatpush1.msra.mxu0 %v222
    %921 = vmatprep.subr.mxu0 0.0
    %922 = vmatpush1.msra.mxu0 %v223
    %923 = vmatprep.subr.mxu0 0.0
    %924 = vmatpush1.msra.mxu0 %v224
    %925 = vmatprep.subr.mxu0 0.0
    %926 = vmatpush1.msra.mxu0 %v225
    %927 = vmatprep.subr.mxu0 0.0
    %928 = vmatpush1.msra.mxu0 %v226
    %929 = vmatprep.subr.mxu0 0.0
    %930 = vmatpush1.msra.mxu0 %v227
    %931 = vmatprep.subr.mxu0 0.0
    %932 = vmatpush1.msra.mxu0 %v228
    %933 = vmatprep.subr.mxu0 0.0
    %934 = vmatpush1.msra.mxu0 %v229
    %935 = vmatprep.subr.mxu0 0.0
    %936 = vmatpush1.msra.mxu0 %v230
    %937 = vmatprep.subr.mxu0 0.0
    %938 = vmatpush1.msra.mxu0 %v231
    %939 = vmatprep.subr.mxu0 0.0
    %940 = vmatpush1.msra.mxu0 %v232
    %941 = vmatprep.subr.mxu0 0.0
    %942 = vmatpush1.msra.mxu0 %v233
    %943 = vmatprep.subr.mxu0 0.0
    %944 = vmatpush1.msra.mxu0 %v234
    %945 = vmatprep.subr.mxu0 0.0
    %946 = vmatpush1.msra.mxu0 %v235
    %947 = vmatprep.subr.mxu0 0.0
    %948 = vmatpush1.msra.mxu0 %v236
    %949 = vmatprep.subr.mxu0 0.0
    %950 = vmatpush1.msra.mxu0 %v237
    %951 = vmatprep.subr.mxu0 0.0
    %952 = vmatpush1.msra.mxu0 %v238
    %953 = vmatprep.subr.mxu0 0.0
    %954 = vmatpush1.msra.mxu0 %v239
    %955 = vmatprep.subr.mxu0 0.0
    %956 = vmatpush1.msra.mxu0 %v240
    %957 = vmatprep.subr.mxu0 0.0
    %958 = vmatpush1.msra.mxu0 %v241
    %959 = vmatprep.subr.mxu0 0.0
    %960 = vmatpush1.msra.mxu0 %v242
    %961 = vmatprep.subr.mxu0 0.0
    %962 = vmatpush1.msra.mxu0 %v243
    %963 = vmatprep.subr.mxu0 0.0
    %964 = vmatpush1.msra.mxu0 %v244
    %965 = vmatprep.subr.mxu0 0.0
    %966 = vmatpush1.msra.mxu0 %v245
    %967 = vmatprep.subr.mxu0 0.0
    %968 = vmatpush1.msra.mxu0 %v246
    %969 = vmatprep.subr.mxu0 0.0
    %970 = vmatpush1.msra.mxu0 %v247
    %971 = vmatprep.mubr.f32.mxu0 %v33
    %972 = vmatmul.mubr.f32.gmra.mrb[0].mxu0 %v32
    %v973 = vpop.f32.mrb[0].mxu0
    %v974 = vadd.f32 %v899, %v973
    %v975 = vpop.f32.mrb[0].mxu0
    %976 = vmatprep.mubr.f32.mxu0 %v65
    %977 = vmatmul.mubr.f32.gmra.mrb[0].mxu0 %v64
    %v978 = vpop.f32.mrb[0].mxu0
    %v979 = vadd.f32 %v904, %v978
    %v980 = vpop.f32.mrb[0].mxu0
    %981 = vdwg.mxu0
    %982 = vmatprep.subr.mxu0 0.0
    %983 = vmatpush1.msra.mxu0 %v248
    %984 = vmatprep.subr.mxu0 0.0
    %985 = vmatpush1.msra.mxu0 %v249
    %986 = vmatprep.subr.mxu0 0.0
    %987 = vmatpush1.msra.mxu0 %v250
    %988 = vmatprep.subr.mxu0 0.0
    %989 = vmatpush1.msra.mxu0 %v251
    %990 = vmatprep.subr.mxu0 0.0
    %991 = vmatpush1.msra.mxu0 %v252
    %992 = vmatprep.subr.mxu0 0.0
    %993 = vmatpush1.msra.mxu0 %v253
    %994 = vmatprep.subr.mxu0 0.0
    %995 = vmatpush1.msra.mxu0 %v254
    %996 = vmatprep.subr.mxu0 0.0
    %997 = vmatpush1.msra.mxu0 %v255
    %998 = vmatprep.subr.mxu0 0.0
    %999 = vmatpush1.msra.mxu0 %v256
    %1000 = vmatprep.subr.mxu0 0.0
    %1001 = vmatpush1.msra.mxu0 %v257
    %1002 = vmatprep.subr.mxu0 0.0
    %1003 = vmatpush1.msra.mxu0 %v258
    %1004 = vmatprep.subr.mxu0 0.0
    %1005 = vmatpush1.msra.mxu0 %v259
    %1006 = vmatprep.subr.mxu0 0.0
    %1007 = vmatpush1.msra.mxu0 %v260
    %1008 = vmatprep.subr.mxu0 0.0
    %1009 = vmatpush1.msra.mxu0 %v261
    %1010 = vmatprep.subr.mxu0 0.0
    %1011 = vmatpush1.msra.mxu0 %v262
    %1012 = vmatprep.subr.mxu0 0.0
    %1013 = vmatpush1.msra.mxu0 %v263
    %1014 = vmatprep.subr.mxu0 0.0
    %1015 = vmatpush1.msra.mxu0 %v264
    %1016 = vmatprep.subr.mxu0 0.0
    %1017 = vmatpush1.msra.mxu0 %v265
    %1018 = vmatprep.subr.mxu0 0.0
    %1019 = vmatpush1.msra.mxu0 %v266
    %1020 = vmatprep.subr.mxu0 0.0
    %1021 = vmatpush1.msra.mxu0 %v267
    %1022 = vmatprep.subr.mxu0 0.0
    %1023 = vmatpush1.msra.mxu0 %v268
    %1024 = vmatprep.subr.mxu0 0.0
    %1025 = vmatpush1.msra.mxu0 %v269
    %1026 = vmatprep.subr.mxu0 0.0
    %1027 = vmatpush1.msra.mxu0 %v270
    %1028 = vmatprep.subr.mxu0 0.0
    %1029 = vmatpush1.msra.mxu0 %v271
    %1030 = vmatprep.subr.mxu0 0.0
    %1031 = vmatpush1.msra.mxu0 %v272
    %1032 = vmatprep.subr.mxu0 0.0
    %1033 = vmatpush1.msra.mxu0 %v273
    %1034 = vmatprep.subr.mxu0 0.0
    %1035 = vmatpush1.msra.mxu0 %v274
    %1036 = vmatprep.subr.mxu0 0.0
    %1037 = vmatpush1.msra.mxu0 %v275
    %1038 = vmatprep.subr.mxu0 0.0
    %1039 = vmatpush1.msra.mxu0 %v276
    %1040 = vmatprep.subr.mxu0 0.0
    %1041 = vmatpush1.msra.mxu0 %v277
    %1042 = vmatprep.subr.mxu0 0.0
    %1043 = vmatpush1.msra.mxu0 %v278
    %1044 = vmatprep.subr.mxu0 0.0
    %1045 = vmatpush1.msra.mxu0 %v279
    %1046 = vmatprep.mubr.f32.mxu0 %v35
    %1047 = vmatmul.mubr.f32.gmra.mrb[0].mxu0 %v34
    %v1048 = vpop.f32.mrb[0].mxu0
    %v1049 = vadd.f32 %v974, %v1048
    %v1050 = vpop.f32.mrb[0].mxu0
    %1051 = vmatprep.mubr.f32.mxu0 %v67
    %1052 = vmatmul.mubr.f32.gmra.mrb[0].mxu0 %v66
    %v1053 = vpop.f32.mrb[0].mxu0
    %v1054 = vadd.f32 %v979, %v1053
    %v1055 = vpop.f32.mrb[0].mxu0
    %1056 = vdwg.mxu0
    %1057 = vmatprep.subr.mxu0 0.0
    %1058 = vmatpush1.msra.mxu0 %v280
    %1059 = vmatprep.subr.mxu0 0.0
    %1060 = vmatpush1.msra.mxu0 %v281
    %1061 = vmatprep.subr.mxu0 0.0
    %1062 = vmatpush1.msra.mxu0 %v282
    %1063 = vmatprep.subr.mxu0 0.0
    %1064 = vmatpush1.msra.mxu0 %v283
    %1065 = vmatprep.subr.mxu0 0.0
    %1066 = vmatpush1.msra.mxu0 %v284
    %1067 = vmatprep.subr.mxu0 0.0
    %1068 = vmatpush1.msra.mxu0 %v285
    %1069 = vmatprep.subr.mxu0 0.0
    %1070 = vmatpush1.msra.mxu0 %v286
    %1071 = vmatprep.subr.mxu0 0.0
    %1072 = vmatpush1.msra.mxu0 %v287
    %1073 = vmatprep.subr.mxu0 0.0
    %1074 = vmatpush1.msra.mxu0 %v288
    %1075 = vmatprep.subr.mxu0 0.0
    %1076 = vmatpush1.msra.mxu0 %v289
    %1077 = vmatprep.subr.mxu0 0.0
    %1078 = vmatpush1.msra.mxu0 %v290
    %1079 = vmatprep.subr.mxu0 0.0
    %1080 = vmatpush1.msra.mxu0 %v291
    %1081 = vmatprep.subr.mxu0 0.0
    %1082 = vmatpush1.msra.mxu0 %v292
    %1083 = vmatprep.subr.mxu0 0.0
    %1084 = vmatpush1.msra.mxu0 %v293
    %1085 = vmatprep.subr.mxu0 0.0
    %1086 = vmatpush1.msra.mxu0 %v294
    %1087 = vmatprep.subr.mxu0 0.0
    %1088 = vmatpush1.msra.mxu0 %v295
    %1089 = vmatprep.subr.mxu0 0.0
    %1090 = vmatpush1.msra.mxu0 %v296
    %1091 = vmatprep.subr.mxu0 0.0
    %1092 = vmatpush1.msra.mxu0 %v297
    %1093 = vmatprep.subr.mxu0 0.0
    %1094 = vmatpush1.msra.mxu0 %v298
    %1095 = vmatprep.subr.mxu0 0.0
    %1096 = vmatpush1.msra.mxu0 %v299
    %1097 = vmatprep.subr.mxu0 0.0
    %1098 = vmatpush1.msra.mxu0 %v300
    %1099 = vmatprep.subr.mxu0 0.0
    %1100 = vmatpush1.msra.mxu0 %v301
    %1101 = vmatprep.subr.mxu0 0.0
    %1102 = vmatpush1.msra.mxu0 %v302
    %1103 = vmatprep.subr.mxu0 0.0
    %1104 = vmatpush1.msra.mxu0 %v303
    %1105 = vmatprep.subr.mxu0 0.0
    %1106 = vmatpush1.msra.mxu0 %v304
    %1107 = vmatprep.subr.mxu0 0.0
    %1108 = vmatpush1.msra.mxu0 %v305
    %1109 = vmatprep.subr.mxu0 0.0
    %1110 = vmatpush1.msra.mxu0 %v306
    %1111 = vmatprep.subr.mxu0 0.0
    %1112 = vmatpush1.msra.mxu0 %v307
    %1113 = vmatprep.subr.mxu0 0.0
    %1114 = vmatpush1.msra.mxu0 %v308
    %1115 = vmatprep.subr.mxu0 0.0
    %1116 = vmatpush1.msra.mxu0 %v309
    %1117 = vmatprep.subr.mxu0 0.0
    %1118 = vmatpush1.msra.mxu0 %v310
    %1119 = vmatprep.subr.mxu0 0.0
    %1120 = vmatpush1.msra.mxu0 %v311
    %1121 = vmatprep.mubr.f32.mxu0 %v37
    %1122 = vmatmul.mubr.f32.gmra.mrb[0].mxu0 %v36
    %v1123 = vpop.f32.mrb[0].mxu0
    %v1124 = vadd.f32 %v1049, %v1123
    %v1125 = vpop.f32.mrb[0].mxu0
    %1126 = vmatprep.mubr.f32.mxu0 %v69
    %1127 = vmatmul.mubr.f32.gmra.mrb[0].mxu0 %v68
    %v1128 = vpop.f32.mrb[0].mxu0
    %v1129 = vadd.f32 %v1054, %v1128
    %v1130 = vpop.f32.mrb[0].mxu0
    %1131 = vdwg.mxu0
    %1132 = vmatprep.subr.mxu0 0.0
    %1133 = vmatpush1.msra.mxu0 %v312
    %1134 = vmatprep.subr.mxu0 0.0
    %1135 = vmatpush1.msra.mxu0 %v313
    %1136 = vmatprep.subr.mxu0 0.0
    %1137 = vmatpush1.msra.mxu0 %v314
    %1138 = vmatprep.subr.mxu0 0.0
    %1139 = vmatpush1.msra.mxu0 %v315
    %1140 = vmatprep.subr.mxu0 0.0
    %1141 = vmatpush1.msra.mxu0 %v316
    %1142 = vmatprep.subr.mxu0 0.0
    %1143 = vmatpush1.msra.mxu0 %v317
    %1144 = vmatprep.subr.mxu0 0.0
    %1145 = vmatpush1.msra.mxu0 %v318
    %1146 = vmatprep.subr.mxu0 0.0
    %1147 = vmatpush1.msra.mxu0 %v319
    %1148 = vmatprep.subr.mxu0 0.0
    %1149 = vmatpush1.msra.mxu0 %v320
    %1150 = vmatprep.subr.mxu0 0.0
    %1151 = vmatpush1.msra.mxu0 %v321
    %1152 = vmatprep.subr.mxu0 0.0
    %1153 = vmatpush1.msra.mxu0 %v322
    %1154 = vmatprep.subr.mxu0 0.0
    %1155 = vmatpush1.msra.mxu0 %v323
    %1156 = vmatprep.subr.mxu0 0.0
    %1157 = vmatpush1.msra.mxu0 %v324
    %1158 = vmatprep.subr.mxu0 0.0
    %1159 = vmatpush1.msra.mxu0 %v325
    %1160 = vmatprep.subr.mxu0 0.0
    %1161 = vmatpush1.msra.mxu0 %v326
    %1162 = vmatprep.subr.mxu0 0.0
    %1163 = vmatpush1.msra.mxu0 %v327
    %1164 = vmatprep.subr.mxu0 0.0
    %1165 = vmatpush1.msra.mxu0 %v328
    %1166 = vmatprep.subr.mxu0 0.0
    %1167 = vmatpush1.msra.mxu0 %v329
    %1168 = vmatprep.subr.mxu0 0.0
    %1169 = vmatpush1.msra.mxu0 %v330
    %1170 = vmatprep.subr.mxu0 0.0
    %1171 = vmatpush1.msra.mxu0 %v331
    %1172 = vmatprep.subr.mxu0 0.0
    %1173 = vmatpush1.msra.mxu0 %v332
    %1174 = vmatprep.subr.mxu0 0.0
    %1175 = vmatpush1.msra.mxu0 %v333
    %1176 = vmatprep.subr.mxu0 0.0
    %1177 = vmatpush1.msra.mxu0 %v334
    %1178 = vmatprep.subr.mxu0 0.0
    %1179 = vmatpush1.msra.mxu0 %v335
    %1180 = vmatprep.subr.mxu0 0.0
    %1181 = vmatpush1.msra.mxu0 %v336
    %1182 = vmatprep.subr.mxu0 0.0
    %1183 = vmatpush1.msra.mxu0 %v337
    %1184 = vmatprep.subr.mxu0 0.0
    %1185 = vmatpush1.msra.mxu0 %v338
    %1186 = vmatprep.subr.mxu0 0.0
    %1187 = vmatpush1.msra.mxu0 %v339
    %1188 = vmatprep.subr.mxu0 0.0
    %1189 = vmatpush1.msra.mxu0 %v340
    %1190 = vmatprep.subr.mxu0 0.0
    %1191 = vmatpush1.msra.mxu0 %v341
    %1192 = vmatprep.subr.mxu0 0.0
    %1193 = vmatpush1.msra.mxu0 %v342
    %1194 = vmatprep.subr.mxu0 0.0
    %1195 = vmatpush1.msra.mxu0 %v343
    %1196 = vmatprep.mubr.f32.mxu0 %v39
    %1197 = vmatmul.mubr.f32.gmra.mrb[0].mxu0 %v38
    %v1198 = vpop.f32.mrb[0].mxu0
    %v1199 = vadd.f32 %v1124, %v1198
    %v1200 = vpop.f32.mrb[0].mxu0
    %1201 = vmatprep.mubr.f32.mxu0 %v71
    %1202 = vmatmul.mubr.f32.gmra.mrb[0].mxu0 %v70
    %v1203 = vpop.f32.mrb[0].mxu0
    %v1204 = vadd.f32 %v1129, %v1203
    %v1205 = vpop.f32.mrb[0].mxu0
    %1206 = vdwg.mxu0
    %1207 = vmatprep.subr.mxu0 0.0
    %1208 = vmatpush1.msra.mxu0 %v344
    %1209 = vmatprep.subr.mxu0 0.0
    %1210 = vmatpush1.msra.mxu0 %v345
    %1211 = vmatprep.subr.mxu0 0.0
    %1212 = vmatpush1.msra.mxu0 %v346
    %1213 = vmatprep.subr.mxu0 0.0
    %1214 = vmatpush1.msra.mxu0 %v347
    %1215 = vmatprep.subr.mxu0 0.0
    %1216 = vmatpush1.msra.mxu0 %v348
    %1217 = vmatprep.subr.mxu0 0.0
    %1218 = vmatpush1.msra.mxu0 %v349
    %1219 = vmatprep.subr.mxu0 0.0
    %1220 = vmatpush1.msra.mxu0 %v350
    %1221 = vmatprep.subr.mxu0 0.0
    %1222 = vmatpush1.msra.mxu0 %v351
    %1223 = vmatprep.subr.mxu0 0.0
    %1224 = vmatpush1.msra.mxu0 %v352
    %1225 = vmatprep.subr.mxu0 0.0
    %1226 = vmatpush1.msra.mxu0 %v353
    %1227 = vmatprep.subr.mxu0 0.0
    %1228 = vmatpush1.msra.mxu0 %v354
    %1229 = vmatprep.subr.mxu0 0.0
    %1230 = vmatpush1.msra.mxu0 %v355
    %1231 = vmatprep.subr.mxu0 0.0
    %1232 = vmatpush1.msra.mxu0 %v356
    %1233 = vmatprep.subr.mxu0 0.0
    %1234 = vmatpush1.msra.mxu0 %v357
    %1235 = vmatprep.subr.mxu0 0.0
    %1236 = vmatpush1.msra.mxu0 %v358
    %1237 = vmatprep.subr.mxu0 0.0
    %1238 = vmatpush1.msra.mxu0 %v359
    %1239 = vmatprep.subr.mxu0 0.0
    %1240 = vmatpush1.msra.mxu0 %v360
    %1241 = vmatprep.subr.mxu0 0.0
    %1242 = vmatpush1.msra.mxu0 %v361
    %1243 = vmatprep.subr.mxu0 0.0
    %1244 = vmatpush1.msra.mxu0 %v362
    %1245 = vmatprep.subr.mxu0 0.0
    %1246 = vmatpush1.msra.mxu0 %v363
    %1247 = vmatprep.subr.mxu0 0.0
    %1248 = vmatpush1.msra.mxu0 %v364
    %1249 = vmatprep.subr.mxu0 0.0
    %1250 = vmatpush1.msra.mxu0 %v365
    %1251 = vmatprep.subr.mxu0 0.0
    %1252 = vmatpush1.msra.mxu0 %v366
    %1253 = vmatprep.subr.mxu0 0.0
    %1254 = vmatpush1.msra.mxu0 %v367
    %1255 = vmatprep.subr.mxu0 0.0
    %1256 = vmatpush1.msra.mxu0 %v368
    %1257 = vmatprep.subr.mxu0 0.0
    %1258 = vmatpush1.msra.mxu0 %v369
    %1259 = vmatprep.subr.mxu0 0.0
    %1260 = vmatpush1.msra.mxu0 %v370
    %1261 = vmatprep.subr.mxu0 0.0
    %1262 = vmatpush1.msra.mxu0 %v371
    %1263 = vmatprep.subr.mxu0 0.0
    %1264 = vmatpush1.msra.mxu0 %v372
    %1265 = vmatprep.subr.mxu0 0.0
    %1266 = vmatpush1.msra.mxu0 %v373
    %1267 = vmatprep.subr.mxu0 0.0
    %1268 = vmatpush1.msra.mxu0 %v374
    %1269 = vmatprep.subr.mxu0 0.0
    %1270 = vmatpush1.msra.mxu0 %v375
    %1271 = vmatprep.mubr.f32.mxu0 %v41
    %1272 = vmatmul.mubr.f32.gmra.mrb[0].mxu0 %v40
    %v1273 = vpop.f32.mrb[0].mxu0
    %v1274 = vadd.f32 %v1199, %v1273
    %v1275 = vpop.f32.mrb[0].mxu0
    %1276 = vmatprep.mubr.f32.mxu0 %v73
    %1277 = vmatmul.mubr.f32.gmra.mrb[0].mxu0 %v72
    %v1278 = vpop.f32.mrb[0].mxu0
    %v1279 = vadd.f32 %v1204, %v1278
    %v1280 = vpop.f32.mrb[0].mxu0
    %1281 = vdwg.mxu0
    %1282 = vmatprep.subr.mxu0 0.0
    %1283 = vmatpush1.msra.mxu0 %v376
    %1284 = vmatprep.subr.mxu0 0.0
    %1285 = vmatpush1.msra.mxu0 %v377
    %1286 = vmatprep.subr.mxu0 0.0
    %1287 = vmatpush1.msra.mxu0 %v378
    %1288 = vmatprep.subr.mxu0 0.0
    %1289 = vmatpush1.msra.mxu0 %v379
    %1290 = vmatprep.subr.mxu0 0.0
    %1291 = vmatpush1.msra.mxu0 %v380
    %1292 = vmatprep.subr.mxu0 0.0
    %1293 = vmatpush1.msra.mxu0 %v381
    %1294 = vmatprep.subr.mxu0 0.0
    %1295 = vmatpush1.msra.mxu0 %v382
    %1296 = vmatprep.subr.mxu0 0.0
    %1297 = vmatpush1.msra.mxu0 %v383
    %1298 = vmatprep.subr.mxu0 0.0
    %1299 = vmatpush1.msra.mxu0 %v384
    %1300 = vmatprep.subr.mxu0 0.0
    %1301 = vmatpush1.msra.mxu0 %v385
    %1302 = vmatprep.subr.mxu0 0.0
    %1303 = vmatpush1.msra.mxu0 %v386
    %1304 = vmatprep.subr.mxu0 0.0
    %1305 = vmatpush1.msra.mxu0 %v387
    %1306 = vmatprep.subr.mxu0 0.0
    %1307 = vmatpush1.msra.mxu0 %v388
    %1308 = vmatprep.subr.mxu0 0.0
    %1309 = vmatpush1.msra.mxu0 %v389
    %1310 = vmatprep.subr.mxu0 0.0
    %1311 = vmatpush1.msra.mxu0 %v390
    %1312 = vmatprep.subr.mxu0 0.0
    %1313 = vmatpush1.msra.mxu0 %v391
    %1314 = vmatprep.subr.mxu0 0.0
    %1315 = vmatpush1.msra.mxu0 %v392
    %1316 = vmatprep.subr.mxu0 0.0
    %1317 = vmatpush1.msra.mxu0 %v393
    %1318 = vmatprep.subr.mxu0 0.0
    %1319 = vmatpush1.msra.mxu0 %v394
    %1320 = vmatprep.subr.mxu0 0.0
    %1321 = vmatpush1.msra.mxu0 %v395
    %1322 = vmatprep.subr.mxu0 0.0
    %1323 = vmatpush1.msra.mxu0 %v396
    %1324 = vmatprep.subr.mxu0 0.0
    %1325 = vmatpush1.msra.mxu0 %v397
    %1326 = vmatprep.subr.mxu0 0.0
    %1327 = vmatpush1.msra.mxu0 %v398
    %1328 = vmatprep.subr.mxu0 0.0
    %1329 = vmatpush1.msra.mxu0 %v399
    %1330 = vmatprep.subr.mxu0 0.0
    %1331 = vmatpush1.msra.mxu0 %v400
    %1332 = vmatprep.subr.mxu0 0.0
    %1333 = vmatpush1.msra.mxu0 %v401
    %1334 = vmatprep.subr.mxu0 0.0
    %1335 = vmatpush1.msra.mxu0 %v402
    %1336 = vmatprep.subr.mxu0 0.0
    %1337 = vmatpush1.msra.mxu0 %v403
    %1338 = vmatprep.subr.mxu0 0.0
    %1339 = vmatpush1.msra.mxu0 %v404
    %1340 = vmatprep.subr.mxu0 0.0
    %1341 = vmatpush1.msra.mxu0 %v405
    %1342 = vmatprep.subr.mxu0 0.0
    %1343 = vmatpush1.msra.mxu0 %v406
    %1344 = vmatprep.subr.mxu0 0.0
    %1345 = vmatpush1.msra.mxu0 %v407
    %1346 = vmatprep.mubr.f32.mxu0 %v43
    %1347 = vmatmul.mubr.f32.gmra.mrb[0].mxu0 %v42
    %v1348 = vpop.f32.mrb[0].mxu0
    %v1349 = vadd.f32 %v1274, %v1348
    %v1350 = vpop.f32.mrb[0].mxu0
    %1351 = vmatprep.mubr.f32.mxu0 %v75
    %1352 = vmatmul.mubr.f32.gmra.mrb[0].mxu0 %v74
    %v1353 = vpop.f32.mrb[0].mxu0
    %v1354 = vadd.f32 %v1279, %v1353
    %v1355 = vpop.f32.mrb[0].mxu0
    %1356 = vdwg.mxu0
    %1357 = vmatprep.subr.mxu0 0.0
    %1358 = vmatpush1.msra.mxu0 %v408
    %1359 = vmatprep.subr.mxu0 0.0
    %1360 = vmatpush1.msra.mxu0 %v409
    %1361 = vmatprep.subr.mxu0 0.0
    %1362 = vmatpush1.msra.mxu0 %v410
    %1363 = vmatprep.subr.mxu0 0.0
    %1364 = vmatpush1.msra.mxu0 %v411
    %1365 = vmatprep.subr.mxu0 0.0
    %1366 = vmatpush1.msra.mxu0 %v412
    %1367 = vmatprep.subr.mxu0 0.0
    %1368 = vmatpush1.msra.mxu0 %v413
    %1369 = vmatprep.subr.mxu0 0.0
    %1370 = vmatpush1.msra.mxu0 %v414
    %1371 = vmatprep.subr.mxu0 0.0
    %1372 = vmatpush1.msra.mxu0 %v415
    %1373 = vmatprep.subr.mxu0 0.0
    %1374 = vmatpush1.msra.mxu0 %v416
    %1375 = vmatprep.subr.mxu0 0.0
    %1376 = vmatpush1.msra.mxu0 %v417
    %1377 = vmatprep.subr.mxu0 0.0
    %1378 = vmatpush1.msra.mxu0 %v418
    %1379 = vmatprep.subr.mxu0 0.0
    %1380 = vmatpush1.msra.mxu0 %v419
    %1381 = vmatprep.subr.mxu0 0.0
    %1382 = vmatpush1.msra.mxu0 %v420
    %1383 = vmatprep.subr.mxu0 0.0
    %1384 = vmatpush1.msra.mxu0 %v421
    %1385 = vmatprep.subr.mxu0 0.0
    %1386 = vmatpush1.msra.mxu0 %v422
    %1387 = vmatprep.subr.mxu0 0.0
    %1388 = vmatpush1.msra.mxu0 %v423
    %1389 = vmatprep.subr.mxu0 0.0
    %1390 = vmatpush1.msra.mxu0 %v424
    %1391 = vmatprep.subr.mxu0 0.0
    %1392 = vmatpush1.msra.mxu0 %v425
    %1393 = vmatprep.subr.mxu0 0.0
    %1394 = vmatpush1.msra.mxu0 %v426
    %1395 = vmatprep.subr.mxu0 0.0
    %1396 = vmatpush1.msra.mxu0 %v427
    %1397 = vmatprep.subr.mxu0 0.0
    %1398 = vmatpush1.msra.mxu0 %v428
    %1399 = vmatprep.subr.mxu0 0.0
    %1400 = vmatpush1.msra.mxu0 %v429
    %1401 = vmatprep.subr.mxu0 0.0
    %1402 = vmatpush1.msra.mxu0 %v430
    %1403 = vmatprep.subr.mxu0 0.0
    %1404 = vmatpush1.msra.mxu0 %v431
    %1405 = vmatprep.subr.mxu0 0.0
    %1406 = vmatpush1.msra.mxu0 %v432
    %1407 = vmatprep.subr.mxu0 0.0
    %1408 = vmatpush1.msra.mxu0 %v433
    %1409 = vmatprep.subr.mxu0 0.0
    %1410 = vmatpush1.msra.mxu0 %v434
    %1411 = vmatprep.subr.mxu0 0.0
    %1412 = vmatpush1.msra.mxu0 %v435
    %1413 = vmatprep.subr.mxu0 0.0
    %1414 = vmatpush1.msra.mxu0 %v436
    %1415 = vmatprep.subr.mxu0 0.0
    %1416 = vmatpush1.msra.mxu0 %v437
    %1417 = vmatprep.subr.mxu0 0.0
    %1418 = vmatpush1.msra.mxu0 %v438
    %1419 = vmatprep.subr.mxu0 0.0
    %1420 = vmatpush1.msra.mxu0 %v439
    %1421 = vmatprep.mubr.f32.mxu0 %v45
    %1422 = vmatmul.mubr.f32.gmra.mrb[0].mxu0 %v44
    %v1423 = vpop.f32.mrb[0].mxu0
    %v1424 = vadd.f32 %v1349, %v1423
    %v1425 = vpop.f32.mrb[0].mxu0
    %1426 = vmatprep.mubr.f32.mxu0 %v77
    %1427 = vmatmul.mubr.f32.gmra.mrb[0].mxu0 %v76
    %v1428 = vpop.f32.mrb[0].mxu0
    %v1429 = vadd.f32 %v1354, %v1428
    %v1430 = vpop.f32.mrb[0].mxu0
    %1431 = vdwg.mxu0
    %1432 = vmatprep.subr.mxu0 0.0
    %1433 = vmatpush1.msra.mxu0 %v440
    %1434 = vmatprep.subr.mxu0 0.0
    %1435 = vmatpush1.msra.mxu0 %v441
    %1436 = vmatprep.subr.mxu0 0.0
    %1437 = vmatpush1.msra.mxu0 %v442
    %1438 = vmatprep.subr.mxu0 0.0
    %1439 = vmatpush1.msra.mxu0 %v443
    %1440 = vmatprep.subr.mxu0 0.0
    %1441 = vmatpush1.msra.mxu0 %v444
    %1442 = vmatprep.subr.mxu0 0.0
    %1443 = vmatpush1.msra.mxu0 %v445
    %1444 = vmatprep.subr.mxu0 0.0
    %1445 = vmatpush1.msra.mxu0 %v446
    %1446 = vmatprep.subr.mxu0 0.0
    %1447 = vmatpush1.msra.mxu0 %v447
    %1448 = vmatprep.subr.mxu0 0.0
    %1449 = vmatpush1.msra.mxu0 %v448
    %1450 = vmatprep.subr.mxu0 0.0
    %1451 = vmatpush1.msra.mxu0 %v449
    %1452 = vmatprep.subr.mxu0 0.0
    %1453 = vmatpush1.msra.mxu0 %v450
    %1454 = vmatprep.subr.mxu0 0.0
    %1455 = vmatpush1.msra.mxu0 %v451
    %1456 = vmatprep.subr.mxu0 0.0
    %1457 = vmatpush1.msra.mxu0 %v452
    %1458 = vmatprep.subr.mxu0 0.0
    %1459 = vmatpush1.msra.mxu0 %v453
    %1460 = vmatprep.subr.mxu0 0.0
    %1461 = vmatpush1.msra.mxu0 %v454
    %1462 = vmatprep.subr.mxu0 0.0
    %1463 = vmatpush1.msra.mxu0 %v455
    %1464 = vmatprep.subr.mxu0 0.0
    %1465 = vmatpush1.msra.mxu0 %v456
    %1466 = vmatprep.subr.mxu0 0.0
    %1467 = vmatpush1.msra.mxu0 %v457
    %1468 = vmatprep.subr.mxu0 0.0
    %1469 = vmatpush1.msra.mxu0 %v458
    %1470 = vmatprep.subr.mxu0 0.0
    %1471 = vmatpush1.msra.mxu0 %v459
    %1472 = vmatprep.subr.mxu0 0.0
    %1473 = vmatpush1.msra.mxu0 %v460
    %1474 = vmatprep.subr.mxu0 0.0
    %1475 = vmatpush1.msra.mxu0 %v461
    %1476 = vmatprep.subr.mxu0 0.0
    %1477 = vmatpush1.msra.mxu0 %v462
    %1478 = vmatprep.subr.mxu0 0.0
    %1479 = vmatpush1.msra.mxu0 %v463
    %1480 = vmatprep.subr.mxu0 0.0
    %1481 = vmatpush1.msra.mxu0 %v464
    %1482 = vmatprep.subr.mxu0 0.0
    %1483 = vmatpush1.msra.mxu0 %v465
    %1484 = vmatprep.subr.mxu0 0.0
    %1485 = vmatpush1.msra.mxu0 %v466
    %1486 = vmatprep.subr.mxu0 0.0
    %1487 = vmatpush1.msra.mxu0 %v467
    %1488 = vmatprep.subr.mxu0 0.0
    %1489 = vmatpush1.msra.mxu0 %v468
    %1490 = vmatprep.subr.mxu0 0.0
    %1491 = vmatpush1.msra.mxu0 %v469
    %1492 = vmatprep.subr.mxu0 0.0
    %1493 = vmatpush1.msra.mxu0 %v470
    %1494 = vmatprep.subr.mxu0 0.0
    %1495 = vmatpush1.msra.mxu0 %v471
    %1496 = vmatprep.mubr.f32.mxu0 %v47
    %1497 = vmatmul.mubr.f32.gmra.mrb[0].mxu0 %v46
    %v1498 = vpop.f32.mrb[0].mxu0
    %v1499 = vadd.f32 %v1424, %v1498
    %v1500 = vpop.f32.mrb[0].mxu0
    %1501 = vmatprep.mubr.f32.mxu0 %v79
    %1502 = vmatmul.mubr.f32.gmra.mrb[0].mxu0 %v78
    %v1503 = vpop.f32.mrb[0].mxu0
    %v1504 = vadd.f32 %v1429, %v1503
    %v1505 = vpop.f32.mrb[0].mxu0
    %1506 = vdwg.mxu0
    %1507 = vmatprep.subr.mxu0 0.0
    %1508 = vmatpush1.msra.mxu0 %v472
    %1509 = vmatprep.subr.mxu0 0.0
    %1510 = vmatpush1.msra.mxu0 %v473
    %1511 = vmatprep.subr.mxu0 0.0
    %1512 = vmatpush1.msra.mxu0 %v474
    %1513 = vmatprep.subr.mxu0 0.0
    %1514 = vmatpush1.msra.mxu0 %v475
    %1515 = vmatprep.subr.mxu0 0.0
    %1516 = vmatpush1.msra.mxu0 %v476
    %1517 = vmatprep.subr.mxu0 0.0
    %1518 = vmatpush1.msra.mxu0 %v477
    %1519 = vmatprep.subr.mxu0 0.0
    %1520 = vmatpush1.msra.mxu0 %v478
    %1521 = vmatprep.subr.mxu0 0.0
    %1522 = vmatpush1.msra.mxu0 %v479
    %1523 = vmatprep.subr.mxu0 0.0
    %1524 = vmatpush1.msra.mxu0 %v480
    %1525 = vmatprep.subr.mxu0 0.0
    %1526 = vmatpush1.msra.mxu0 %v481
    %1527 = vmatprep.subr.mxu0 0.0
    %1528 = vmatpush1.msra.mxu0 %v482
    %1529 = vmatprep.subr.mxu0 0.0
    %1530 = vmatpush1.msra.mxu0 %v483
    %1531 = vmatprep.subr.mxu0 0.0
    %1532 = vmatpush1.msra.mxu0 %v484
    %1533 = vmatprep.subr.mxu0 0.0
    %1534 = vmatpush1.msra.mxu0 %v485
    %1535 = vmatprep.subr.mxu0 0.0
    %1536 = vmatpush1.msra.mxu0 %v486
    %1537 = vmatprep.subr.mxu0 0.0
    %1538 = vmatpush1.msra.mxu0 %v487
    %1539 = vmatprep.subr.mxu0 0.0
    %1540 = vmatpush1.msra.mxu0 %v488
    %1541 = vmatprep.subr.mxu0 0.0
    %1542 = vmatpush1.msra.mxu0 %v489
    %1543 = vmatprep.subr.mxu0 0.0
    %1544 = vmatpush1.msra.mxu0 %v490
    %1545 = vmatprep.subr.mxu0 0.0
    %1546 = vmatpush1.msra.mxu0 %v491
    %1547 = vmatprep.subr.mxu0 0.0
    %1548 = vmatpush1.msra.mxu0 %v492
    %1549 = vmatprep.subr.mxu0 0.0
    %1550 = vmatpush1.msra.mxu0 %v493
    %1551 = vmatprep.subr.mxu0 0.0
    %1552 = vmatpush1.msra.mxu0 %v494
    %1553 = vmatprep.subr.mxu0 0.0
    %1554 = vmatpush1.msra.mxu0 %v495
    %1555 = vmatprep.subr.mxu0 0.0
    %1556 = vmatpush1.msra.mxu0 %v496
    %1557 = vmatprep.subr.mxu0 0.0
    %1558 = vmatpush1.msra.mxu0 %v497
    %1559 = vmatprep.subr.mxu0 0.0
    %1560 = vmatpush1.msra.mxu0 %v498
    %1561 = vmatprep.subr.mxu0 0.0
    %1562 = vmatpush1.msra.mxu0 %v499
    %1563 = vmatprep.subr.mxu0 0.0
    %1564 = vmatpush1.msra.mxu0 %v500
    %1565 = vmatprep.subr.mxu0 0.0
    %1566 = vmatpush1.msra.mxu0 %v501
    %1567 = vmatprep.subr.mxu0 0.0
    %1568 = vmatpush1.msra.mxu0 %v502
    %1569 = vmatprep.subr.mxu0 0.0
    %1570 = vmatpush1.msra.mxu0 %v503
    %1571 = vmatprep.mubr.f32.mxu0 %v49
    %1572 = vmatmul.mubr.f32.gmra.mrb[0].mxu0 %v48
    %v1573 = vpop.f32.mrb[0].mxu0
    %v1574 = vadd.f32 %v1499, %v1573
    %v1575 = vpop.f32.mrb[0].mxu0
    %1576 = vmatprep.mubr.f32.mxu0 %v81
    %1577 = vmatmul.mubr.f32.gmra.mrb[0].mxu0 %v80
    %v1578 = vpop.f32.mrb[0].mxu0
    %v1579 = vadd.f32 %v1504, %v1578
    %v1580 = vpop.f32.mrb[0].mxu0
    %1581 = vdwg.mxu0
    %1582 = vmatprep.subr.mxu0 0.0
    %1583 = vmatpush1.msra.mxu0 %v504
    %1584 = vmatprep.subr.mxu0 0.0
    %1585 = vmatpush1.msra.mxu0 %v505
    %1586 = vmatprep.subr.mxu0 0.0
    %1587 = vmatpush1.msra.mxu0 %v506
    %1588 = vmatprep.subr.mxu0 0.0
    %1589 = vmatpush1.msra.mxu0 %v507
    %1590 = vmatprep.subr.mxu0 0.0
    %1591 = vmatpush1.msra.mxu0 %v508
    %1592 = vmatprep.subr.mxu0 0.0
    %1593 = vmatpush1.msra.mxu0 %v509
    %1594 = vmatprep.subr.mxu0 0.0
    %1595 = vmatpush1.msra.mxu0 %v510
    %1596 = vmatprep.subr.mxu0 0.0
    %1597 = vmatpush1.msra.mxu0 %v511
    %1598 = vmatprep.subr.mxu0 0.0
    %1599 = vmatpush1.msra.mxu0 %v512
    %1600 = vmatprep.subr.mxu0 0.0
    %1601 = vmatpush1.msra.mxu0 %v513
    %1602 = vmatprep.subr.mxu0 0.0
    %1603 = vmatpush1.msra.mxu0 %v514
    %1604 = vmatprep.subr.mxu0 0.0
    %1605 = vmatpush1.msra.mxu0 %v515
    %1606 = vmatprep.subr.mxu0 0.0
    %1607 = vmatpush1.msra.mxu0 %v516
    %1608 = vmatprep.subr.mxu0 0.0
    %1609 = vmatpush1.msra.mxu0 %v517
    %1610 = vmatprep.subr.mxu0 0.0
    %1611 = vmatpush1.msra.mxu0 %v518
    %1612 = vmatprep.subr.mxu0 0.0
    %1613 = vmatpush1.msra.mxu0 %v519
    %1614 = vmatprep.subr.mxu0 0.0
    %1615 = vmatpush1.msra.mxu0 %v520
    %1616 = vmatprep.subr.mxu0 0.0
    %1617 = vmatpush1.msra.mxu0 %v521
    %1618 = vmatprep.subr.mxu0 0.0
    %1619 = vmatpush1.msra.mxu0 %v522
    %1620 = vmatprep.subr.mxu0 0.0
    %1621 = vmatpush1.msra.mxu0 %v523
    %1622 = vmatprep.subr.mxu0 0.0
    %1623 = vmatpush1.msra.mxu0 %v524
    %1624 = vmatprep.subr.mxu0 0.0
    %1625 = vmatpush1.msra.mxu0 %v525
    %1626 = vmatprep.subr.mxu0 0.0
    %1627 = vmatpush1.msra.mxu0 %v526
    %1628 = vmatprep.subr.mxu0 0.0
    %1629 = vmatpush1.msra.mxu0 %v527
    %1630 = vmatprep.subr.mxu0 0.0
    %1631 = vmatpush1.msra.mxu0 %v528
    %1632 = vmatprep.subr.mxu0 0.0
    %1633 = vmatpush1.msra.mxu0 %v529
    %1634 = vmatprep.subr.mxu0 0.0
    %1635 = vmatpush1.msra.mxu0 %v530
    %1636 = vmatprep.subr.mxu0 0.0
    %1637 = vmatpush1.msra.mxu0 %v531
    %1638 = vmatprep.subr.mxu0 0.0
    %1639 = vmatpush1.msra.mxu0 %v532
    %1640 = vmatprep.subr.mxu0 0.0
    %1641 = vmatpush1.msra.mxu0 %v533
    %1642 = vmatprep.subr.mxu0 0.0
    %1643 = vmatpush1.msra.mxu0 %v534
    %1644 = vmatprep.subr.mxu0 0.0
    %1645 = vmatpush1.msra.mxu0 %v535
    %1646 = vmatprep.mubr.f32.mxu0 %v51
    %1647 = vmatmul.mubr.f32.gmra.mrb[0].mxu0 %v50
    %v1648 = vpop.f32.mrb[0].mxu0
    %v1649 = vadd.f32 %v1574, %v1648
    %v1650 = vpop.f32.mrb[0].mxu0
    %1651 = vmatprep.mubr.f32.mxu0 %v83
    %1652 = vmatmul.mubr.f32.gmra.mrb[0].mxu0 %v82
    %v1653 = vpop.f32.mrb[0].mxu0
    %v1654 = vadd.f32 %v1579, %v1653
    %v1655 = vpop.f32.mrb[0].mxu0
    %1656 = vdwg.mxu0
    %1657 = vmatprep.subr.mxu0 0.0
    %1658 = vmatpush1.msra.mxu0 %v536
    %1659 = vmatprep.subr.mxu0 0.0
    %1660 = vmatpush1.msra.mxu0 %v537
    %1661 = vmatprep.subr.mxu0 0.0
    %1662 = vmatpush1.msra.mxu0 %v538
    %1663 = vmatprep.subr.mxu0 0.0
    %1664 = vmatpush1.msra.mxu0 %v539
    %1665 = vmatprep.subr.mxu0 0.0
    %1666 = vmatpush1.msra.mxu0 %v540
    %1667 = vmatprep.subr.mxu0 0.0
    %1668 = vmatpush1.msra.mxu0 %v541
    %1669 = vmatprep.subr.mxu0 0.0
    %1670 = vmatpush1.msra.mxu0 %v542
    %1671 = vmatprep.subr.mxu0 0.0
    %1672 = vmatpush1.msra.mxu0 %v543
    %1673 = vmatprep.subr.mxu0 0.0
    %1674 = vmatpush1.msra.mxu0 %v544
    %1675 = vmatprep.subr.mxu0 0.0
    %1676 = vmatpush1.msra.mxu0 %v545
    %1677 = vmatprep.subr.mxu0 0.0
    %1678 = vmatpush1.msra.mxu0 %v546
    %1679 = vmatprep.subr.mxu0 0.0
    %1680 = vmatpush1.msra.mxu0 %v547
    %1681 = vmatprep.subr.mxu0 0.0
    %1682 = vmatpush1.msra.mxu0 %v548
    %1683 = vmatprep.subr.mxu0 0.0
    %1684 = vmatpush1.msra.mxu0 %v549
    %1685 = vmatprep.subr.mxu0 0.0
    %1686 = vmatpush1.msra.mxu0 %v550
    %1687 = vmatprep.subr.mxu0 0.0
    %1688 = vmatpush1.msra.mxu0 %v551
    %1689 = vmatprep.subr.mxu0 0.0
    %1690 = vmatpush1.msra.mxu0 %v552
    %1691 = vmatprep.subr.mxu0 0.0
    %1692 = vmatpush1.msra.mxu0 %v553
    %1693 = vmatprep.subr.mxu0 0.0
    %1694 = vmatpush1.msra.mxu0 %v554
    %1695 = vmatprep.subr.mxu0 0.0
    %1696 = vmatpush1.msra.mxu0 %v555
    %1697 = vmatprep.subr.mxu0 0.0
    %1698 = vmatpush1.msra.mxu0 %v556
    %1699 = vmatprep.subr.mxu0 0.0
    %1700 = vmatpush1.msra.mxu0 %v557
    %1701 = vmatprep.subr.mxu0 0.0
    %1702 = vmatpush1.msra.mxu0 %v558
    %1703 = vmatprep.subr.mxu0 0.0
    %1704 = vmatpush1.msra.mxu0 %v559
    %1705 = vmatprep.subr.mxu0 0.0
    %1706 = vmatpush1.msra.mxu0 %v560
    %1707 = vmatprep.subr.mxu0 0.0
    %1708 = vmatpush1.msra.mxu0 %v561
    %1709 = vmatprep.subr.mxu0 0.0
    %1710 = vmatpush1.msra.mxu0 %v562
    %1711 = vmatprep.subr.mxu0 0.0
    %1712 = vmatpush1.msra.mxu0 %v563
    %1713 = vmatprep.subr.mxu0 0.0
    %1714 = vmatpush1.msra.mxu0 %v564
    %1715 = vmatprep.subr.mxu0 0.0
    %1716 = vmatpush1.msra.mxu0 %v565
    %1717 = vmatprep.subr.mxu0 0.0
    %1718 = vmatpush1.msra.mxu0 %v566
    %1719 = vmatprep.subr.mxu0 0.0
    %1720 = vmatpush1.msra.mxu0 %v567
    %1721 = vmatprep.mubr.f32.mxu0 %v53
    %1722 = vmatmul.mubr.f32.gmra.mrb[0].mxu0 %v52
    %v1723 = vpop.f32.mrb[0].mxu0
    %v1724 = vadd.f32 %v1649, %v1723
    %v1725 = vpop.f32.mrb[0].mxu0
    %1726 = vmatprep.mubr.f32.mxu0 %v85
    %1727 = vmatmul.mubr.f32.gmra.mrb[0].mxu0 %v84
    %v1728 = vpop.f32.mrb[0].mxu0
    %v1729 = vadd.f32 %v1654, %v1728
    %v1730 = vpop.f32.mrb[0].mxu0
    %1731 = vdwg.mxu0
    %1732 = vmatprep.subr.mxu0 0.0
    %1733 = vmatpush1.msra.mxu0 %v568
    %1734 = vmatprep.subr.mxu0 0.0
    %1735 = vmatpush1.msra.mxu0 %v569
    %1736 = vmatprep.subr.mxu0 0.0
    %1737 = vmatpush1.msra.mxu0 %v570
    %1738 = vmatprep.subr.mxu0 0.0
    %1739 = vmatpush1.msra.mxu0 %v571
    %1740 = vmatprep.subr.mxu0 0.0
    %1741 = vmatpush1.msra.mxu0 %v572
    %1742 = vmatprep.subr.mxu0 0.0
    %1743 = vmatpush1.msra.mxu0 %v573
    %1744 = vmatprep.subr.mxu0 0.0
    %1745 = vmatpush1.msra.mxu0 %v574
    %1746 = vmatprep.subr.mxu0 0.0
    %1747 = vmatpush1.msra.mxu0 %v575
    %1748 = vmatprep.subr.mxu0 0.0
    %1749 = vmatpush1.msra.mxu0 %v576
    %1750 = vmatprep.subr.mxu0 0.0
    %1751 = vmatpush1.msra.mxu0 %v577
    %1752 = vmatprep.subr.mxu0 0.0
    %1753 = vmatpush1.msra.mxu0 %v578
    %1754 = vmatprep.subr.mxu0 0.0
    %1755 = vmatpush1.msra.mxu0 %v579
    %1756 = vmatprep.subr.mxu0 0.0
    %1757 = vmatpush1.msra.mxu0 %v580
    %1758 = vmatprep.subr.mxu0 0.0
    %1759 = vmatpush1.msra.mxu0 %v581
    %1760 = vmatprep.subr.mxu0 0.0
    %1761 = vmatpush1.msra.mxu0 %v582
    %1762 = vmatprep.subr.mxu0 0.0
    %1763 = vmatpush1.msra.mxu0 %v583
    %1764 = vmatprep.subr.mxu0 0.0
    %1765 = vmatpush1.msra.mxu0 %v584
    %1766 = vmatprep.subr.mxu0 0.0
    %1767 = vmatpush1.msra.mxu0 %v585
    %1768 = vmatprep.subr.mxu0 0.0
    %1769 = vmatpush1.msra.mxu0 %v586
    %1770 = vmatprep.subr.mxu0 0.0
    %1771 = vmatpush1.msra.mxu0 %v587
    %1772 = vmatprep.subr.mxu0 0.0
    %1773 = vmatpush1.msra.mxu0 %v588
    %1774 = vmatprep.subr.mxu0 0.0
    %1775 = vmatpush1.msra.mxu0 %v589
    %1776 = vmatprep.subr.mxu0 0.0
    %1777 = vmatpush1.msra.mxu0 %v590
    %1778 = vmatprep.subr.mxu0 0.0
    %1779 = vmatpush1.msra.mxu0 %v591
    %1780 = vmatprep.subr.mxu0 0.0
    %1781 = vmatpush1.msra.mxu0 %v592
    %1782 = vmatprep.subr.mxu0 0.0
    %1783 = vmatpush1.msra.mxu0 %v593
    %1784 = vmatprep.subr.mxu0 0.0
    %1785 = vmatpush1.msra.mxu0 %v594
    %1786 = vmatprep.subr.mxu0 0.0
    %1787 = vmatpush1.msra.mxu0 %v595
    %1788 = vmatprep.subr.mxu0 0.0
    %1789 = vmatpush1.msra.mxu0 %v596
    %1790 = vmatprep.subr.mxu0 0.0
    %1791 = vmatpush1.msra.mxu0 %v597
    %1792 = vmatprep.subr.mxu0 0.0
    %1793 = vmatpush1.msra.mxu0 %v598
    %1794 = vmatprep.subr.mxu0 0.0
    %1795 = vmatpush1.msra.mxu0 %v599
    %1796 = vmatprep.mubr.f32.mxu0 %v55
    %1797 = vmatmul.mubr.f32.gmra.mrb[0].mxu0 %v54
    %v1798 = vpop.f32.mrb[0].mxu0
    %v1799 = vadd.f32 %v1724, %v1798
    %v1800 = vpop.f32.mrb[0].mxu0
    %1801 = vmatprep.mubr.f32.mxu0 %v87
    %1802 = vmatmul.mubr.f32.gmra.mrb[0].mxu0 %v86
    %v1803 = vpop.f32.mrb[0].mxu0
    %v1804 = vadd.f32 %v1729, %v1803
    %v1805 = vpop.f32.mrb[0].mxu0
    %1806 = vdwg.mxu0
    %v1807 = vmax.f32 %v1799, 0.0
    %v1808 = vmax.f32 %v1804, 0.0
    %v1809 = vld [vmem:[%s3] sm:$0xff]
    %v1810 = vld [vmem:[%s3 + $0x8] sm:$0xff]
    %v1811 = vld [vmem:[%s3 + $0x10] sm:$0xff]
    %v1812 = vld [vmem:[%s3 + $0x18] sm:$0xff]
    %v1813 = vld [vmem:[%s3 + $0x20] sm:$0xff]
    %v1814 = vld [vmem:[%s3 + $0x28] sm:$0xff]
    %v1815 = vld [vmem:[%s3 + $0x30] sm:$0xff]
    %v1816 = vld [vmem:[%s3 + $0x38] sm:$0xff]
    %v1817 = vld [vmem:[%s4] sm:$0x1]
    %v1819 = vlaneseq
    %v1820 = vshrl.u32 %v1819, 7
    %v1821 = vsub.s32 0, %v1820
    %v1822 = vrot.slane %v1817, %v1821
    %vm1824 = vcmask 523264
    %v1826 = vsel %vm1824, %v1807, 0
    %v1829 = vsel %vm1824, %v1808, 0
    %1831 = vmatprep.subr.mxu0 0.0
    %1832 = vmatpush1.msra.mxu0 %v1809
    %1833 = vmatprep.subr.mxu0 0.0
    %1834 = vmatpush1.msra.mxu0 %v1810
    %1835 = vmatprep.subr.mxu0 0.0
    %1836 = vmatpush1.msra.mxu0 %v1811
    %1837 = vmatprep.subr.mxu0 0.0
    %1838 = vmatpush1.msra.mxu0 %v1812
    %1839 = vmatprep.subr.mxu0 0.0
    %1840 = vmatpush1.msra.mxu0 %v1813
    %1841 = vmatprep.subr.mxu0 0.0
    %1842 = vmatpush1.msra.mxu0 %v1814
    %1843 = vmatprep.subr.mxu0 0.0
    %1844 = vmatpush1.msra.mxu0 %v1815
    %1845 = vmatprep.subr.mxu0 0.0
    %1846 = vmatpush1.msra.mxu0 %v1816
    %1847 = vmatprep.subr.mxu0 0.0
    %1848 = vmatpush1.msra.mxu0 0.0
    %1849 = vmatprep.subr.mxu0 0.0
    %1850 = vmatpush1.msra.mxu0 0.0
    %1851 = vmatprep.subr.mxu0 0.0
    %1852 = vmatpush1.msra.mxu0 0.0
    %1853 = vmatprep.subr.mxu0 0.0
    %1854 = vmatpush1.msra.mxu0 0.0
    %1855 = vmatprep.subr.mxu0 0.0
    %1856 = vmatpush1.msra.mxu0 0.0
    %1857 = vmatprep.subr.mxu0 0.0
    %1858 = vmatpush1.msra.mxu0 0.0
    %1859 = vmatprep.subr.mxu0 0.0
    %1860 = vmatpush1.msra.mxu0 0.0
    %1861 = vmatprep.subr.mxu0 0.0
    %1862 = vmatpush1.msra.mxu0 0.0
    %1863 = vmatprep.subr.mxu0 0.0
    %1864 = vmatpush1.msra.mxu0 0.0
    %1865 = vmatprep.subr.mxu0 0.0
    %1866 = vmatpush1.msra.mxu0 0.0
    %1867 = vmatprep.subr.mxu0 0.0
    %1868 = vmatpush1.msra.mxu0 0.0
    %1869 = vmatprep.subr.mxu0 0.0
    %1870 = vmatpush1.msra.mxu0 0.0
    %1871 = vmatprep.subr.mxu0 0.0
    %1872 = vmatpush1.msra.mxu0 0.0
    %1873 = vmatprep.subr.mxu0 0.0
    %1874 = vmatpush1.msra.mxu0 0.0
    %1875 = vmatprep.subr.mxu0 0.0
    %1876 = vmatpush1.msra.mxu0 0.0
    %1877 = vmatprep.subr.mxu0 0.0
    %1878 = vmatpush1.msra.mxu0 0.0
    %1879 = vmatprep.subr.mxu0 0.0
    %1880 = vmatpush1.msra.mxu0 0.0
    %1881 = vmatprep.subr.mxu0 0.0
    %1882 = vmatpush1.msra.mxu0 0.0
    %1883 = vmatprep.subr.mxu0 0.0
    %1884 = vmatpush1.msra.mxu0 0.0
    %1885 = vmatprep.subr.mxu0 0.0
    %1886 = vmatpush1.msra.mxu0 0.0
    %1887 = vmatprep.subr.mxu0 0.0
    %1888 = vmatpush1.msra.mxu0 0.0
    %1889 = vmatprep.subr.mxu0 0.0
    %1890 = vmatpush1.msra.mxu0 0.0
    %1891 = vmatprep.subr.mxu0 0.0
    %1892 = vmatpush1.msra.mxu0 0.0
    %1893 = vmatprep.subr.mxu0 0.0
    %1894 = vmatpush1.msra.mxu0 0.0
    %1895 = vmatprep.mubr.f32.mxu0 0.0
    %1896 = vmatmul.mubr.f32.gmra.mrb[0].mxu0 %v1826
    %v1897 = vpop.f32.mrb[0].mxu0
    %v1898 = vadd.f32 %v1822, %v1897
    %v1899 = vpop.f32.mrb[0].mxu0
    %1900 = vmatprep.mubr.f32.mxu0 0.0
    %1901 = vmatmul.mubr.f32.gmra.mrb[0].mxu0 %v1829
    %v1902 = vpop.f32.mrb[0].mxu0
    %v1903 = vadd.f32 %v1822, %v1902
    %v1904 = vpop.f32.mrb[0].mxu0
    %1905 = vdwg.mxu0
    %v1906 = vmax.f32 %v1898, 0.0
    %v1907 = vmax.f32 %v1903, 0.0
    %v1908 = vld [vmem:[%s5] sm:$0x1]
    %v1910 = vsel %vm1824, %v1908, 0
    %v1913 = vsel %vm1824, %v1906, 0
    %v1916 = vsel %vm1824, %v1907, 0
    %1918 = vmatprep.subr.mxu0 0.0
    %1919 = vmatpush1.xpose.msra.mxu0 %v1913
    %1920 = vmatprep.subr.mxu0 0.0
    %1921 = vmatpush1.xpose.msra.mxu0 %v1916
    %1922 = vmatprep.subr.mxu0 0.0
    %1923 = vmatpush1.xpose.msra.mxu0 0.0
    %1924 = vmatprep.subr.mxu0 0.0
    %1925 = vmatpush1.xpose.msra.mxu0 0.0
    %1926 = vmatprep.subr.mxu0 0.0
    %1927 = vmatpush1.xpose.msra.mxu0 0.0
    %1928 = vmatprep.subr.mxu0 0.0
    %1929 = vmatpush1.xpose.msra.mxu0 0.0
    %1930 = vmatprep.subr.mxu0 0.0
    %1931 = vmatpush1.xpose.msra.mxu0 0.0
    %1932 = vmatprep.subr.mxu0 0.0
    %1933 = vmatpush1.xpose.msra.mxu0 0.0
    %1934 = vmatprep.subr.mxu0 0.0
    %1935 = vmatpush1.xpose.msra.mxu0 0.0
    %1936 = vmatprep.subr.mxu0 0.0
    %1937 = vmatpush1.xpose.msra.mxu0 0.0
    %1938 = vmatprep.subr.mxu0 0.0
    %1939 = vmatpush1.xpose.msra.mxu0 0.0
    %1940 = vmatprep.subr.mxu0 0.0
    %1941 = vmatpush1.xpose.msra.mxu0 0.0
    %1942 = vmatprep.subr.mxu0 0.0
    %1943 = vmatpush1.xpose.msra.mxu0 0.0
    %1944 = vmatprep.subr.mxu0 0.0
    %1945 = vmatpush1.xpose.msra.mxu0 0.0
    %1946 = vmatprep.subr.mxu0 0.0
    %1947 = vmatpush1.xpose.msra.mxu0 0.0
    %1948 = vmatprep.subr.mxu0 0.0
    %1949 = vmatpush1.xpose.msra.mxu0 0.0
    %1950 = vmatprep.subr.mxu0 0.0
    %1951 = vmatpush1.xpose.msra.mxu0 0.0
    %1952 = vmatprep.subr.mxu0 0.0
    %1953 = vmatpush1.xpose.msra.mxu0 0.0
    %1954 = vmatprep.subr.mxu0 0.0
    %1955 = vmatpush1.xpose.msra.mxu0 0.0
    %1956 = vmatprep.subr.mxu0 0.0
    %1957 = vmatpush1.xpose.msra.mxu0 0.0
    %1958 = vmatprep.subr.mxu0 0.0
    %1959 = vmatpush1.xpose.msra.mxu0 0.0
    %1960 = vmatprep.subr.mxu0 0.0
    %1961 = vmatpush1.xpose.msra.mxu0 0.0
    %1962 = vmatprep.subr.mxu0 0.0
    %1963 = vmatpush1.xpose.msra.mxu0 0.0
    %1964 = vmatprep.subr.mxu0 0.0
    %1965 = vmatpush1.xpose.msra.mxu0 0.0
    %1966 = vmatprep.subr.mxu0 0.0
    %1967 = vmatpush1.xpose.msra.mxu0 0.0
    %1968 = vmatprep.subr.mxu0 0.0
    %1969 = vmatpush1.xpose.msra.mxu0 0.0
    %1970 = vmatprep.subr.mxu0 0.0
    %1971 = vmatpush1.xpose.msra.mxu0 0.0
    %1972 = vmatprep.subr.mxu0 0.0
    %1973 = vmatpush1.xpose.msra.mxu0 0.0
    %1974 = vmatprep.subr.mxu0 0.0
    %1975 = vmatpush1.xpose.msra.mxu0 0.0
    %1976 = vmatprep.subr.mxu0 0.0
    %1977 = vmatpush1.xpose.msra.mxu0 0.0
    %1978 = vmatprep.subr.mxu0 0.0
    %1979 = vmatpush1.xpose.msra.mxu0 0.0
    %1980 = vmatprep.subr.mxu0 0.0
    %1981 = vmatpush1.xpose.msra.mxu0 0.0
    %1982 = vmatprep.mubr.f32.mxu0 0.0
    %1983 = vmatmul.mubr.f32.gmra.mrb[0].mxu0 %v1910
    %v1984 = vpop.f32.mrb[0].mxu0
    %v1985 = vadd.f32 0.0, %v1984
    %v1986 = vpop.f32.mrb[0].mxu0
    %1987 = vdwg.mxu0
    %vm1988 = vcmask 122880
    %1989 = vst.msk [vmem:[#allocation2] sm:$0x1] %vm1988, %v1985
    // Predicated region
    $region26: #{tpu_custom_call.1} parent=1 // pred_check
      _
    $region27: #{tpu_custom_call.1} parent=1 // pred_check_branch
      %1991 = sbr.rel (0) target = $region29
    $region28: #{tpu_custom_call.1} parent=1 // pred_region
      %s1993 = ssub.s32 16, 16
      %1994 = vsyncadd [#allocation3], %s1993
      %s1996 = sshll.u32 [#allocation2], 4
      %s1997 = int_to_ptr.vmem [resolvable:$true] %s1996
      %1999 = dma.vmem_to_hbm [thread:$0]  %s1997, 16, %s6, [#allocation3]
    $region29: #{tpu_custom_call.1} parent=1 // pred_fallthru
      _
    // Predicated region
    $region30: #{tpu_custom_call.1} parent=1 // pred_check
      _
    $region31: #{tpu_custom_call.1} parent=1 // pred_check_branch
      %2001 = sbr.rel (0) target = $region33
    $region32: #{tpu_custom_call.1} parent=1 // pred_region
      %2002 = dma.done [#allocation3], 16
    $region33: #{tpu_custom_call.1} parent=1 // pred_fallthru
      _
    %2003 = vsyncpa [#allocation3], 1

</llo_original>
